<compile_context>
chip_gen: v7x
topology: tpu7x:2x2x1
jax: 0.10.0
libtpu: 0.0.40
codegen_flags: <defaults>
</compile_context>

<pallas_src>
import functools
import math

import jax
import jax.numpy as jnp
from jax.experimental import pallas as pl
from jax.experimental.pallas import tpu as pltpu

EPS = 1e-5           # torch BatchNorm2d default
MAX_ROW_TILE = 512   # M row tile; keeps double-buffered tiles far below the
                     # v5e 16 MiB scoped-VMEM default (and v6e/v7x limits).

LENET1 = [{'out_channels': 4}, {'out_channels': 12}]
LENET4 = [{'out_channels': 4}, {'out_channels': 16}]
LENET5 = [{'out_channels': 6}, {'out_channels': 16}]


def _lenet_config(variant):
    if variant == 1:
        return LENET1
    if variant == 4:
        return LENET4
    if variant == 5:
        return LENET5
    raise ValueError('Valid LeNet variants: 1, 4, 5.')


def _block_cfg(block):
    cfg = dict(conv_kernel=5, conv_stride=2, pool_kernel=2, pool_stride=2)
    cfg.update(block)
    return cfg


def _round_up(x, m):
    return ((x + m - 1) // m) * m


def _row_tile(m):
    return MAX_ROW_TILE if m >= MAX_ROW_TILE else max(8, _round_up(m, 8))


# ----------------------------- Pallas kernels -----------------------------

def _conv_stats_kernel(p_ref, w_ref, y_ref, st_ref):
    """One M-tile of (im2col @ weight) + per-tile BN partial sums.

    p_ref: (TM, K) bf16    w_ref: (K, Cp) bf16 (constant index -> resident)
    y_ref: (TM, Cp) f32    st_ref: (1, 2, Cp) f32 [row0: sum, row1: sum of sq]
    """
    y = jnp.dot(p_ref[...], w_ref[...], preferred_element_type=jnp.float32)
    y_ref[...] = y
    s1 = jnp.sum(y, axis=0, keepdims=True)
    s2 = jnp.sum(y * y, axis=0, keepdims=True)
    st_ref[...] = jnp.concatenate([s1, s2], axis=0)[None]


def _conv_stats(p, w, tm):
    mp, k = p.shape
    cp = w.shape[1]
    n_tiles = mp // tm
    return pl.pallas_call(
        _conv_stats_kernel,
        out_shape=(jax.ShapeDtypeStruct((mp, cp), jnp.float32),
                   jax.ShapeDtypeStruct((n_tiles, 2, cp), jnp.float32)),
        grid=(n_tiles,),
        in_specs=[pl.BlockSpec((tm, k), lambda i: (i, 0)),
                  pl.BlockSpec((k, cp), lambda i: (0, 0))],
        out_specs=(pl.BlockSpec((tm, cp), lambda i: (i, 0)),
                   pl.BlockSpec((1, 2, cp), lambda i: (i, 0, 0))),
        compiler_params=pltpu.CompilerParams(
            dimension_semantics=("parallel",)),
    )(p, w)


def _bn_relu_pool_kernel(y_ref, s_ref, t_ref, o_ref):
    """Fused BN-affine + ReLU + MaxPool2d(2, stride 2) for one image.

    y_ref: (1, 2*Hp, Wp, 2*Cp) f32  -- W-neighbour pairs packed into lanes.
    o_ref: (1, Hp, Wp, Cp) f32
    """
    hp, wp, cp = o_ref.shape[1], o_ref.shape[2], o_ref.shape[3]
    s = s_ref[...].reshape(1, 1, 1, 2 * cp)
    t = t_ref[...].reshape(1, 1, 1, 2 * cp)
    z = jnp.maximum(y_ref[...] * s + t, 0.0)        # (1, 2*Hp, Wp, 2*Cp)
    z = z.reshape(hp, 2, wp, 2 * cp)                # split H pairs (leading dims only)
    z = jnp.max(z, axis=1)                          # pool over H -> (Hp, Wp, 2*Cp)
    o_ref[...] = jnp.maximum(z[:, :, :cp], z[:, :, cp:])[None]   # pool over W


def _bn_relu_pool(y_w, s2, t2, hp, wp, cp):
    n, _, _, c2 = y_w.shape
    return pl.pallas_call(
        _bn_relu_pool_kernel,
        out_shape=jax.ShapeDtypeStruct((n, hp, wp, cp), jnp.float32),
        grid=(n,),
        in_specs=[pl.BlockSpec((1, 2 * hp, wp, c2), lambda i: (i, 0, 0, 0)),
                  pl.BlockSpec((1, c2), lambda i: (0, 0)),
                  pl.BlockSpec((1, c2), lambda i: (0, 0))],
        out_specs=pl.BlockSpec((1, hp, wp, cp), lambda i: (i, 0, 0, 0)),
        compiler_params=pltpu.CompilerParams(
            dimension_semantics=("parallel",)),
    )(y_w, s2, t2)


def _bn_relu_kernel(y_ref, s_ref, t_ref, o_ref):
    o_ref[...] = jnp.maximum(y_ref[...] * s_ref[...] + t_ref[...], 0.0)


def _bn_relu(y, s, t, tm):
    """BN-affine + ReLU only (Identity-pool blocks)."""
    mp, cp = y.shape
    return pl.pallas_call(
        _bn_relu_kernel,
        out_shape=jax.ShapeDtypeStruct((mp, cp), jnp.float32),
        grid=(mp // tm,),
        in_specs=[pl.BlockSpec((tm, cp), lambda i: (i, 0)),
                  pl.BlockSpec((1, cp), lambda i: (0, 0)),
                  pl.BlockSpec((1, cp), lambda i: (0, 0))],
        out_specs=pl.BlockSpec((tm, cp), lambda i: (i, 0)),
        compiler_params=pltpu.CompilerParams(
            dimension_semantics=("parallel",)),
    )(y, s, t)


# ------------------------------- JAX glue ----------------------------------

def _im2col(x_nhwc, k, stride):
    """k x k patches (stride, no padding) -> (N*Ho*Wo, k*k*C), Ho, Wo."""
    n, h, w, c = x_nhwc.shape
    ho = (h - k) // stride + 1
    wo = (w - k) // stride + 1
    cols = []
    for dy in range(k):
        for dx in range(k):
            cols.append(x_nhwc[:, dy:dy + stride * ho:stride,
                               dx:dx + stride * wo:stride, :])
    p = jnp.stack(cols, axis=3)                    # (N, Ho, Wo, k*k, C)
    return p.reshape(n * ho * wo, k * k * c), ho, wo


def _lenet_block(x_nhwc, params, *, kernel, stride, do_pool):
    w, _b, gamma, beta = params    # conv bias unused: cancelled by train-mode BN
    n, h, wth, cin = x_nhwc.shape
    cout = w.shape[0]
    if h < kernel or wth < kernel:
        raise ValueError('spatial input too small for the stride-2 conv')

    patches, ho, wo = _im2col(x_nhwc, kernel, stride)
    if do_pool and (ho < 2 or wo < 2):
        raise ValueError('conv output too small for the 2x2 stride-2 max-pool')

    m, k = patches.shape
    cp = _round_up(cout, 128)
    tm = _row_tile(m)
    mp = _round_up(m, tm)

    # bf16 operands (f32 MXU accumulation), K left unpadded, rows zero-padded.
    p_pad = jnp.pad(patches.astype(jnp.bfloat16), ((0, mp - m), (0, 0)))
    w_mat = jnp.transpose(w, (2, 3, 1, 0)).reshape(k, cout)   # (dy, dx, cin) order
    w_pad = jnp.pad(w_mat, ((0, 0), (0, cp - cout))).astype(jnp.bfloat16)

    y_pad, stats = _conv_stats(p_pad, w_pad, tm)   # (Mp, Cp) f32, (Mp//tm, 2, Cp)

    # BatchNorm2d training mode: biased per-channel stats over N*Ho*Wo rows.
    # Zero pad rows / pad channels contribute nothing to the partial sums.
    cnt = jnp.float32(m)
    mean = jnp.sum(stats[:, 0, :cout], axis=0) / cnt
    var = jnp.maximum(jnp.sum(stats[:, 1, :cout], axis=0) / cnt - mean * mean, 0.0)
    scale = gamma * jax.lax.rsqrt(var + EPS)
    shift = beta - mean * scale
    s_pad = jnp.pad(scale, (0, cp - cout))
    t_pad = jnp.pad(shift, (0, cp - cout))

    if do_pool:                                    # MaxPool2d(2, stride=2)
        hp, wp = ho // 2, wo // 2
        y4 = y_pad[:m].reshape(n, ho, wo, cp)
        # Pack W-neighbour pairs into the lane axis (free row-major reshape) so
        # the fused BN+ReLU+pool kernel never needs strided sublane access.
        y_w = y4[:, :, :2 * wp, :].reshape(n, ho, wp, 2 * cp)
        s2 = jnp.concatenate([s_pad, s_pad]).reshape(1, 2 * cp)
        t2 = jnp.concatenate([t_pad, t_pad]).reshape(1, 2 * cp)
        z = _bn_relu_pool(y_w, s2, t2, hp, wp, cp)           # (N, Hp, Wp, Cp)
    else:                                          # Identity pool
        z_pad = _bn_relu(y_pad, s_pad.reshape(1, cp), t_pad.reshape(1, cp), tm)
        z = z_pad[:m].reshape(n, ho, wo, cp)

    return z[..., :cout]                           # strip channel padding


@functools.partial(jax.jit, static_argnames=('variant',))
def lenet_enc(x_nchw, params, variant=1):
    x = jnp.transpose(x_nchw, (0, 2, 3, 1)).astype(jnp.float32)   # NCHW -> NHWC
    for p, block in zip(params, _lenet_config(variant)):
        cfg = _block_cfg(block)
        x = _lenet_block(x, p, kernel=cfg['conv_kernel'],
                         stride=cfg['conv_stride'],
                         do_pool=cfg['pool_kernel'] != 1)
    return jnp.transpose(x, (0, 3, 1, 2))                         # NHWC -> NCHW


def init_params(key, in_channels, variant=1):
    """torch-like init: conv U(-1/sqrt(fan_in), +), BN gamma=1 / beta=0."""
    params = []
    cin = in_channels
    for block in _lenet_config(variant):
        cfg = _block_cfg(block)
        cout, k = cfg['out_channels'], cfg['conv_kernel']
        key, k1, k2 = jax.random.split(key, 3)
        bound = 1.0 / math.sqrt(cin * k * k)
        w = jax.random.uniform(k1, (cout, cin, k, k), jnp.float32, -bound, bound)
        b = jax.random.uniform(k2, (cout,), jnp.float32, -bound, bound)  # unused (BN cancels it)
        gamma = jnp.ones((cout,), jnp.float32)
        beta = jnp.zeros((cout,), jnp.float32)
        params.append((w, b, gamma, beta))
        cin = cout
    return params


if __name__ == "__main__":
    key = jax.random.PRNGKey(0)
    pkey, xkey = jax.random.split(key)

    # LeNet variant 1 (out_channels 4 -> 12), 1 input channel.  Two conv-5x5
    # stride-2 + pool-2x2 blocks need spatial >= 31; 64x64 keeps the example
    # small while exercising both pooling stages (final spatial 3x3).
    params = init_params(pkey, in_channels=1, variant=1)
    x = jax.random.normal(xkey, (2, 1, 64, 64), jnp.float32)

    out = jax.block_until_ready(lenet_enc(x, params))
    assert out.shape == (2, 12, 3, 3), out.shape
    assert bool(jnp.all(jnp.isfinite(out)))
    print("KERNEL_OK")
</pallas_src>

<mosaic_0001>
module attributes {stable_mosaic.version = 11 : i64} {
  func.func @_conv_stats_kernel(%arg0: i32, %arg1: memref<512x25xbf16, #tpu.memory_space<vmem>>, %arg2: memref<25x128xbf16, #tpu.memory_space<vmem>>, %arg3: memref<512x128xf32, #tpu.memory_space<vmem>>, %arg4: memref<1x2x128xf32, #tpu.memory_space<vmem>>) attributes {dimension_semantics = [#tpu.dimension_semantics<parallel>], iteration_bounds = array<i64: 4>, scalar_prefetch = 0 : i64, scratch_operands = 0 : i64, tpu.core_type = #tpu.core_type<tc>, window_params = [{transform_indices = @transform_0, window_bounds = array<i64: 512, 25>}, {pipeline_mode = #tpu.pipeline_mode<synchronous>, transform_indices = @transform_1, window_bounds = array<i64: 25, 128>}, {transform_indices = @transform_2, window_bounds = array<i64: 512, 128>}, {transform_indices = @transform_3, window_bounds = array<i64: 1, 2, 128>}]} {
    %c0 = arith.constant 0 : index
    %c0_0 = arith.constant 0 : index
    %0 = vector.load %arg1[%c0, %c0_0] : memref<512x25xbf16, #tpu.memory_space<vmem>>, vector<512x25xbf16>
    %c0_1 = arith.constant 0 : index
    %c0_2 = arith.constant 0 : index
    %1 = vector.load %arg2[%c0_1, %c0_2] : memref<25x128xbf16, #tpu.memory_space<vmem>>, vector<25x128xbf16>
    %cst = arith.constant dense<0.000000e+00> : vector<512x128xf32>
    %2 = tpu.matmul %0, %1, %cst {dimension_numbers = #tpu.dot_dimension_numbers<[1], [0], [0], [1], [0, 0, 1, 1], [], []>} : vector<512x25xbf16>, vector<25x128xbf16>, vector<512x128xf32> -> vector<512x128xf32>
    %c0_3 = arith.constant 0 : index
    %c0_4 = arith.constant 0 : index
    %3 = vector.load %arg3[%c0_3, %c0_4] : memref<512x128xf32, #tpu.memory_space<vmem>>, vector<512x128xf32>
    tpu.vector_store %arg3[%c0_3, %c0_4], %2 {strides = array<i32>} : memref<512x128xf32, #tpu.memory_space<vmem>>, vector<512x128xf32>,
    %cst_5 = arith.constant dense<0.000000e+00> : vector<128xf32>
    %4 = vector.multi_reduction <add>, %2, %cst_5 [0] : vector<512x128xf32> to vector<128xf32>
    %5 = vector.shape_cast %4 : vector<128xf32> to vector<1x128xf32>
    %6 = arith.mulf %2, %2 : vector<512x128xf32>
    %cst_6 = arith.constant dense<0.000000e+00> : vector<128xf32>
    %7 = vector.multi_reduction <add>, %6, %cst_6 [0] : vector<512x128xf32> to vector<128xf32>
    %8 = vector.shape_cast %7 : vector<128xf32> to vector<1x128xf32>
    %9 = tpu.concatenate %5, %8 in 0 : vector<1x128xf32>, vector<1x128xf32> -> vector<2x128xf32>
    %10 = vector.shape_cast %9 : vector<2x128xf32> to vector<1x2x128xf32>
    %c0_7 = arith.constant 0 : index
    %c0_8 = arith.constant 0 : index
    %c0_9 = arith.constant 0 : index
    %11 = vector.load %arg4[%c0_7, %c0_8, %c0_9] : memref<1x2x128xf32, #tpu.memory_space<vmem>>, vector<1x2x128xf32>
    tpu.vector_store %arg4[%c0_7, %c0_8, %c0_9], %10 {strides = array<i32>} : memref<1x2x128xf32, #tpu.memory_space<vmem>>, vector<1x2x128xf32>,
    return
  }
  func.func @transform_0(%arg0: i32) -> (i32, i32) {
    %c0_i32 = arith.constant 0 : i32
    %c0_i32_0 = arith.constant 0 : i32
    return %arg0, %c0_i32 : i32, i32
  }
  func.func @transform_1(%arg0: i32) -> (i32, i32) {
    %c0_i32 = arith.constant 0 : i32
    %c0_i32_0 = arith.constant 0 : i32
    %c0_i32_1 = arith.constant 0 : i32
    return %c0_i32, %c0_i32_0 : i32, i32
  }
  func.func @transform_2(%arg0: i32) -> (i32, i32) {
    %c0_i32 = arith.constant 0 : i32
    %c0_i32_0 = arith.constant 0 : i32
    return %arg0, %c0_i32 : i32, i32
  }
  func.func @transform_3(%arg0: i32) -> (i32, i32, i32) {
    %c0_i32 = arith.constant 0 : i32
    %c0_i32_0 = arith.constant 0 : i32
    %c0_i32_1 = arith.constant 0 : i32
    return %arg0, %c0_i32, %c0_i32_0 : i32, i32, i32
  }
}

module attributes {stable_mosaic.version = 11 : i64} {
  func.func @_bn_relu_pool_kernel(%arg0: i32, %arg1: memref<1x30x15x256xf32, #tpu.memory_space<vmem>>, %arg2: memref<1x256xf32, #tpu.memory_space<vmem>>, %arg3: memref<1x256xf32, #tpu.memory_space<vmem>>, %arg4: memref<1x15x15x128xf32, #tpu.memory_space<vmem>>) attributes {dimension_semantics = [#tpu.dimension_semantics<parallel>], iteration_bounds = array<i64: 2>, scalar_prefetch = 0 : i64, scratch_operands = 0 : i64, tpu.core_type = #tpu.core_type<tc>, window_params = [{transform_indices = @transform_0, window_bounds = array<i64: 1, 30, 15, 256>}, {pipeline_mode = #tpu.pipeline_mode<synchronous>, transform_indices = @transform_1, window_bounds = array<i64: 1, 256>}, {pipeline_mode = #tpu.pipeline_mode<synchronous>, transform_indices = @transform_2, window_bounds = array<i64: 1, 256>}, {transform_indices = @transform_3, window_bounds = array<i64: 1, 15, 15, 128>}]} {
    %c0 = arith.constant 0 : index
    %c0_0 = arith.constant 0 : index
    %0 = vector.load %arg2[%c0, %c0_0] : memref<1x256xf32, #tpu.memory_space<vmem>>, vector<1x256xf32>
    %1 = vector.shape_cast %0 : vector<1x256xf32> to vector<1x1x1x256xf32>
    %c0_1 = arith.constant 0 : index
    %c0_2 = arith.constant 0 : index
    %2 = vector.load %arg3[%c0_1, %c0_2] : memref<1x256xf32, #tpu.memory_space<vmem>>, vector<1x256xf32>
    %3 = vector.shape_cast %2 : vector<1x256xf32> to vector<1x1x1x256xf32>
    %c0_3 = arith.constant 0 : index
    %c0_4 = arith.constant 0 : index
    %c0_5 = arith.constant 0 : index
    %c0_6 = arith.constant 0 : index
    %4 = vector.load %arg1[%c0_3, %c0_4, %c0_5, %c0_6] : memref<1x30x15x256xf32, #tpu.memory_space<vmem>>, vector<1x30x15x256xf32>
    %5 = vector.broadcast %1 : vector<1x1x1x256xf32> to vector<1x30x15x256xf32>
    %6 = arith.mulf %4, %5 : vector<1x30x15x256xf32>
    %7 = vector.broadcast %3 : vector<1x1x1x256xf32> to vector<1x30x15x256xf32>
    %8 = arith.addf %6, %7 : vector<1x30x15x256xf32>
    %cst = arith.constant 0.000000e+00 : f32
    %9 = vector.broadcast %cst : f32 to vector<1x30x15x256xf32>
    %10 = arith.maximumf %8, %9 : vector<1x30x15x256xf32>
    %11 = vector.shape_cast %10 : vector<1x30x15x256xf32> to vector<15x2x15x256xf32>
    %cst_7 = arith.constant dense<0xFF800000> : vector<15x15x256xf32>
    %12 = vector.multi_reduction <maximumf>, %11, %cst_7 [1] : vector<15x2x15x256xf32> to vector<15x15x256xf32>
    %13 = vector.extract_strided_slice %12 {offsets = [0, 0, 0], sizes = [15, 15, 128], strides = [1, 1, 1]} : vector<15x15x256xf32> to vector<15x15x128xf32>
    %14 = vector.extract_strided_slice %12 {offsets = [0, 0, 128], sizes = [15, 15, 128], strides = [1, 1, 1]} : vector<15x15x256xf32> to vector<15x15x128xf32>
    %15 = arith.maximumf %13, %14 : vector<15x15x128xf32>
    %16 = vector.shape_cast %15 : vector<15x15x128xf32> to vector<1x15x15x128xf32>
    %c0_8 = arith.constant 0 : index
    %c0_9 = arith.constant 0 : index
    %c0_10 = arith.constant 0 : index
    %c0_11 = arith.constant 0 : index
    %17 = vector.load %arg4[%c0_8, %c0_9, %c0_10, %c0_11] : memref<1x15x15x128xf32, #tpu.memory_space<vmem>>, vector<1x15x15x128xf32>
    tpu.vector_store %arg4[%c0_8, %c0_9, %c0_10, %c0_11], %16 {strides = array<i32>} : memref<1x15x15x128xf32, #tpu.memory_space<vmem>>, vector<1x15x15x128xf32>,
    return
  }
  func.func @transform_0(%arg0: i32) -> (i32, i32, i32, i32) {
    %c0_i32 = arith.constant 0 : i32
    %c0_i32_0 = arith.constant 0 : i32
    %c0_i32_1 = arith.constant 0 : i32
    %c0_i32_2 = arith.constant 0 : i32
    return %arg0, %c0_i32, %c0_i32_0, %c0_i32_1 : i32, i32, i32, i32
  }
  func.func @transform_1(%arg0: i32) -> (i32, i32) {
    %c0_i32 = arith.constant 0 : i32
    %c0_i32_0 = arith.constant 0 : i32
    %c0_i32_1 = arith.constant 0 : i32
    return %c0_i32, %c0_i32_0 : i32, i32
  }
  func.func @transform_2(%arg0: i32) -> (i32, i32) {
    %c0_i32 = arith.constant 0 : i32
    %c0_i32_0 = arith.constant 0 : i32
    %c0_i32_1 = arith.constant 0 : i32
    return %c0_i32, %c0_i32_0 : i32, i32
  }
  func.func @transform_3(%arg0: i32) -> (i32, i32, i32, i32) {
    %c0_i32 = arith.constant 0 : i32
    %c0_i32_0 = arith.constant 0 : i32
    %c0_i32_1 = arith.constant 0 : i32
    %c0_i32_2 = arith.constant 0 : i32
    return %arg0, %c0_i32, %c0_i32_0, %c0_i32_1 : i32, i32, i32, i32
  }
}

module attributes {stable_mosaic.version = 11 : i64} {
  func.func @_conv_stats_kernel(%arg0: i32, %arg1: memref<72x100xbf16, #tpu.memory_space<vmem>>, %arg2: memref<100x128xbf16, #tpu.memory_space<vmem>>, %arg3: memref<72x128xf32, #tpu.memory_space<vmem>>, %arg4: memref<1x2x128xf32, #tpu.memory_space<vmem>>) attributes {dimension_semantics = [#tpu.dimension_semantics<parallel>], iteration_bounds = array<i64: 1>, scalar_prefetch = 0 : i64, scratch_operands = 0 : i64, tpu.core_type = #tpu.core_type<tc>, window_params = [{transform_indices = @transform_0, window_bounds = array<i64: 72, 100>}, {pipeline_mode = #tpu.pipeline_mode<synchronous>, transform_indices = @transform_1, window_bounds = array<i64: 100, 128>}, {transform_indices = @transform_2, window_bounds = array<i64: 72, 128>}, {transform_indices = @transform_3, window_bounds = array<i64: 1, 2, 128>}]} {
    %c0 = arith.constant 0 : index
    %c0_0 = arith.constant 0 : index
    %0 = vector.load %arg1[%c0, %c0_0] : memref<72x100xbf16, #tpu.memory_space<vmem>>, vector<72x100xbf16>
    %c0_1 = arith.constant 0 : index
    %c0_2 = arith.constant 0 : index
    %1 = vector.load %arg2[%c0_1, %c0_2] : memref<100x128xbf16, #tpu.memory_space<vmem>>, vector<100x128xbf16>
    %cst = arith.constant dense<0.000000e+00> : vector<72x128xf32>
    %2 = tpu.matmul %0, %1, %cst {dimension_numbers = #tpu.dot_dimension_numbers<[1], [0], [0], [1], [0, 0, 1, 1], [], []>} : vector<72x100xbf16>, vector<100x128xbf16>, vector<72x128xf32> -> vector<72x128xf32>
    %c0_3 = arith.constant 0 : index
    %c0_4 = arith.constant 0 : index
    %3 = vector.load %arg3[%c0_3, %c0_4] : memref<72x128xf32, #tpu.memory_space<vmem>>, vector<72x128xf32>
    tpu.vector_store %arg3[%c0_3, %c0_4], %2 {strides = array<i32>} : memref<72x128xf32, #tpu.memory_space<vmem>>, vector<72x128xf32>,
    %cst_5 = arith.constant dense<0.000000e+00> : vector<128xf32>
    %4 = vector.multi_reduction <add>, %2, %cst_5 [0] : vector<72x128xf32> to vector<128xf32>
    %5 = vector.shape_cast %4 : vector<128xf32> to vector<1x128xf32>
    %6 = arith.mulf %2, %2 : vector<72x128xf32>
    %cst_6 = arith.constant dense<0.000000e+00> : vector<128xf32>
    %7 = vector.multi_reduction <add>, %6, %cst_6 [0] : vector<72x128xf32> to vector<128xf32>
    %8 = vector.shape_cast %7 : vector<128xf32> to vector<1x128xf32>
    %9 = tpu.concatenate %5, %8 in 0 : vector<1x128xf32>, vector<1x128xf32> -> vector<2x128xf32>
    %10 = vector.shape_cast %9 : vector<2x128xf32> to vector<1x2x128xf32>
    %c0_7 = arith.constant 0 : index
    %c0_8 = arith.constant 0 : index
    %c0_9 = arith.constant 0 : index
    %11 = vector.load %arg4[%c0_7, %c0_8, %c0_9] : memref<1x2x128xf32, #tpu.memory_space<vmem>>, vector<1x2x128xf32>
    tpu.vector_store %arg4[%c0_7, %c0_8, %c0_9], %10 {strides = array<i32>} : memref<1x2x128xf32, #tpu.memory_space<vmem>>, vector<1x2x128xf32>,
    return
  }
  func.func @transform_0(%arg0: i32) -> (i32, i32) {
    %c0_i32 = arith.constant 0 : i32
    %c0_i32_0 = arith.constant 0 : i32
    return %arg0, %c0_i32 : i32, i32
  }
  func.func @transform_1(%arg0: i32) -> (i32, i32) {
    %c0_i32 = arith.constant 0 : i32
    %c0_i32_0 = arith.constant 0 : i32
    %c0_i32_1 = arith.constant 0 : i32
    return %c0_i32, %c0_i32_0 : i32, i32
  }
  func.func @transform_2(%arg0: i32) -> (i32, i32) {
    %c0_i32 = arith.constant 0 : i32
    %c0_i32_0 = arith.constant 0 : i32
    return %arg0, %c0_i32 : i32, i32
  }
  func.func @transform_3(%arg0: i32) -> (i32, i32, i32) {
    %c0_i32 = arith.constant 0 : i32
    %c0_i32_0 = arith.constant 0 : i32
    %c0_i32_1 = arith.constant 0 : i32
    return %arg0, %c0_i32, %c0_i32_0 : i32, i32, i32
  }
}

module attributes {stable_mosaic.version = 11 : i64} {
  func.func @_bn_relu_pool_kernel(%arg0: i32, %arg1: memref<1x6x3x256xf32, #tpu.memory_space<vmem>>, %arg2: memref<1x256xf32, #tpu.memory_space<vmem>>, %arg3: memref<1x256xf32, #tpu.memory_space<vmem>>, %arg4: memref<1x3x3x128xf32, #tpu.memory_space<vmem>>) attributes {dimension_semantics = [#tpu.dimension_semantics<parallel>], iteration_bounds = array<i64: 2>, scalar_prefetch = 0 : i64, scratch_operands = 0 : i64, tpu.core_type = #tpu.core_type<tc>, window_params = [{transform_indices = @transform_0, window_bounds = array<i64: 1, 6, 3, 256>}, {pipeline_mode = #tpu.pipeline_mode<synchronous>, transform_indices = @transform_1, window_bounds = array<i64: 1, 256>}, {pipeline_mode = #tpu.pipeline_mode<synchronous>, transform_indices = @transform_2, window_bounds = array<i64: 1, 256>}, {transform_indices = @transform_3, window_bounds = array<i64: 1, 3, 3, 128>}]} {
    %c0 = arith.constant 0 : index
    %c0_0 = arith.constant 0 : index
    %0 = vector.load %arg2[%c0, %c0_0] : memref<1x256xf32, #tpu.memory_space<vmem>>, vector<1x256xf32>
    %1 = vector.shape_cast %0 : vector<1x256xf32> to vector<1x1x1x256xf32>
    %c0_1 = arith.constant 0 : index
    %c0_2 = arith.constant 0 : index
    %2 = vector.load %arg3[%c0_1, %c0_2] : memref<1x256xf32, #tpu.memory_space<vmem>>, vector<1x256xf32>
    %3 = vector.shape_cast %2 : vector<1x256xf32> to vector<1x1x1x256xf32>
    %c0_3 = arith.constant 0 : index
    %c0_4 = arith.constant 0 : index
    %c0_5 = arith.constant 0 : index
    %c0_6 = arith.constant 0 : index
    %4 = vector.load %arg1[%c0_3, %c0_4, %c0_5, %c0_6] : memref<1x6x3x256xf32, #tpu.memory_space<vmem>>, vector<1x6x3x256xf32>
    %5 = vector.broadcast %1 : vector<1x1x1x256xf32> to vector<1x6x3x256xf32>
    %6 = arith.mulf %4, %5 : vector<1x6x3x256xf32>
    %7 = vector.broadcast %3 : vector<1x1x1x256xf32> to vector<1x6x3x256xf32>
    %8 = arith.addf %6, %7 : vector<1x6x3x256xf32>
    %cst = arith.constant 0.000000e+00 : f32
    %9 = vector.broadcast %cst : f32 to vector<1x6x3x256xf32>
    %10 = arith.maximumf %8, %9 : vector<1x6x3x256xf32>
    %11 = vector.shape_cast %10 : vector<1x6x3x256xf32> to vector<3x2x3x256xf32>
    %cst_7 = arith.constant dense<0xFF800000> : vector<3x3x256xf32>
    %12 = vector.multi_reduction <maximumf>, %11, %cst_7 [1] : vector<3x2x3x256xf32> to vector<3x3x256xf32>
    %13 = vector.extract_strided_slice %12 {offsets = [0, 0, 0], sizes = [3, 3, 128], strides = [1, 1, 1]} : vector<3x3x256xf32> to vector<3x3x128xf32>
    %14 = vector.extract_strided_slice %12 {offsets = [0, 0, 128], sizes = [3, 3, 128], strides = [1, 1, 1]} : vector<3x3x256xf32> to vector<3x3x128xf32>
    %15 = arith.maximumf %13, %14 : vector<3x3x128xf32>
    %16 = vector.shape_cast %15 : vector<3x3x128xf32> to vector<1x3x3x128xf32>
    %c0_8 = arith.constant 0 : index
    %c0_9 = arith.constant 0 : index
    %c0_10 = arith.constant 0 : index
    %c0_11 = arith.constant 0 : index
    %17 = vector.load %arg4[%c0_8, %c0_9, %c0_10, %c0_11] : memref<1x3x3x128xf32, #tpu.memory_space<vmem>>, vector<1x3x3x128xf32>
    tpu.vector_store %arg4[%c0_8, %c0_9, %c0_10, %c0_11], %16 {strides = array<i32>} : memref<1x3x3x128xf32, #tpu.memory_space<vmem>>, vector<1x3x3x128xf32>,
    return
  }
  func.func @transform_0(%arg0: i32) -> (i32, i32, i32, i32) {
    %c0_i32 = arith.constant 0 : i32
    %c0_i32_0 = arith.constant 0 : i32
    %c0_i32_1 = arith.constant 0 : i32
    %c0_i32_2 = arith.constant 0 : i32
    return %arg0, %c0_i32, %c0_i32_0, %c0_i32_1 : i32, i32, i32, i32
  }
  func.func @transform_1(%arg0: i32) -> (i32, i32) {
    %c0_i32 = arith.constant 0 : i32
    %c0_i32_0 = arith.constant 0 : i32
    %c0_i32_1 = arith.constant 0 : i32
    return %c0_i32, %c0_i32_0 : i32, i32
  }
  func.func @transform_2(%arg0: i32) -> (i32, i32) {
    %c0_i32 = arith.constant 0 : i32
    %c0_i32_0 = arith.constant 0 : i32
    %c0_i32_1 = arith.constant 0 : i32
    return %c0_i32, %c0_i32_0 : i32, i32
  }
  func.func @transform_3(%arg0: i32) -> (i32, i32, i32, i32) {
    %c0_i32 = arith.constant 0 : i32
    %c0_i32_0 = arith.constant 0 : i32
    %c0_i32_1 = arith.constant 0 : i32
    %c0_i32_2 = arith.constant 0 : i32
    return %arg0, %c0_i32, %c0_i32_0, %c0_i32_1 : i32, i32, i32, i32
  }
}

</mosaic_0001>

<llo_original>
// kernel: lenet_enc.4
$region0: #{lenet_enc.4}
  #allocation0 [shape = 'u32[]', space=smem, size = 0x4, offset = 0x4, fixed_abs, tag = 'smem constant byte address 0x4 - core index']
  #allocation1 [shape = 'u32[144,128]{1,0:T(1,128)}', space=vmem, size = 0x12000, scoped, tag = 'internal scratch']
  %s0 = inlined_call_operand.vmem [shape: bf16[2048,25], index: 0, kind: input, shape index: {}]
  %s1 = inlined_call_operand.vmem [shape: bf16[25,128], index: 1, kind: input, shape index: {}]
  %s2 = inlined_call_operand.vmem [shape: f32[2048,128], index: 2, kind: output, shape index: {0}]
  %s3 = inlined_call_operand.vmem [shape: f32[4,2,128], index: 3, kind: output, shape index: {1}]
  %4 = xla_tuple %s2, %s3
  %s5 = sld [smem:[#allocation0]]
  $region49: #{lenet_enc.4} parent=0
    _
  %s7 = ssub.s32 1, %s5
  %s8 = scalar_select 0, %s7, %s5
  loop: start=0, step=1, limit=6
  $region2: #{lenet_enc.4} parent=0 // loop_pre_header
    _
  $region3: #{lenet_enc.4} parent=0 // loop_header
    %s10 = sphi 0, %s14
    %p11 = scmp.ge.s32.totalorder %s10, 6
    %s20 = sphi 0, %s22
    %s23 = sphi 0, %s20
    %s24 = sphi 0, %s23
    %s40 = sphi 0, %s24
    %s44 = sphi 0, %s44
    %s46 = sphi 0, %s44
    %s47 = sphi 0, %s46
    %s61 = sphi 0, %s47
    %s67 = sphi 0, %s69
    %s70 = sphi 0, %s67
    %s71 = sphi 0, %s70
    %s87 = sphi 0, %s71
    %s93 = sphi 0, %s95
    %s96 = sphi 0, %s93
    %s97 = sphi 0, %s96
    %s113 = sphi 0, %s97
  $region4: #{lenet_enc.4} parent=0 // loop_header_branch
    %13 = sbr.rel (%p11) target = $region8
  $region5: #{lenet_enc.4} parent=0 // loop_body
    %s15 = ssub.s32 %s10, 1
    %s16 = ssub.s32 %s10, 2
    %s17 = sadd.s32 %s10, 1
    %s18 = ssub.s32 %s10, %s17
    %p19 = scmp.eq.s32.totalorder %s18, 0
    %s21 = sadd.s32 %s20, 1
    %s22 = scalar_select %p19, %s20, %s21
    %p25 = pneg %p19
    %p26 = scmp.eq.s32.totalorder %s10, 3
    %p27 = por %p25, %p26
    %p28 = scmp.ne.s32.totalorder %s20, %s23
    %p29 = scmp.eq.s32.totalorder %s10, 0
    %p30 = por %p28, %p29
    %p31 = scmp.ne.s32.totalorder %s20, %s23
    %p32 = scmp.eq.s32.totalorder %s15, 3
    %p33 = por %p31, %p32
    %p34 = scmp.ne.s32.totalorder %s23, %s24
    %p35 = scmp.eq.s32.totalorder %s15, 0
    %p36 = por %p34, %p35
    %p37 = scmp.ne.s32.totalorder %s23, %s24
    %p38 = scmp.eq.s32.totalorder %s16, 3
    %p39 = por %p37, %p38
    %p41 = scmp.ne.s32.totalorder %s24, %s40
    %p42 = scmp.eq.s32.totalorder %s16, 0
    %p43 = por %p41, %p42
    %s45 = sadd.s32 %s44, 1
    %p48 = scmp.eq.s32.totalorder %s10, 3
    %p49 = scmp.ne.s32.totalorder %s44, %s46
    %p50 = scmp.eq.s32.totalorder %s10, 0
    %p51 = por %p49, %p50
    %p52 = scmp.ne.s32.totalorder %s44, %s46
    %p53 = scmp.eq.s32.totalorder %s15, 3
    %p54 = por %p52, %p53
    %p55 = scmp.ne.s32.totalorder %s46, %s47
    %p56 = scmp.eq.s32.totalorder %s15, 0
    %p57 = por %p55, %p56
    %p58 = scmp.ne.s32.totalorder %s46, %s47
    %p59 = scmp.eq.s32.totalorder %s16, 3
    %p60 = por %p58, %p59
    %p62 = scmp.ne.s32.totalorder %s47, %s61
    %p63 = scmp.eq.s32.totalorder %s16, 0
    %p64 = por %p62, %p63
    %s65 = ssub.s32 %s10, %s17
    %p66 = scmp.eq.s32.totalorder %s65, 0
    %s68 = sadd.s32 %s67, 1
    %s69 = scalar_select %p66, %s67, %s68
    %p72 = pneg %p66
    %p73 = scmp.eq.s32.totalorder %s10, 3
    %p74 = por %p72, %p73
    %p75 = scmp.ne.s32.totalorder %s67, %s70
    %p76 = scmp.eq.s32.totalorder %s10, 0
    %p77 = por %p75, %p76
    %p78 = scmp.ne.s32.totalorder %s67, %s70
    %p79 = scmp.eq.s32.totalorder %s15, 3
    %p80 = por %p78, %p79
    %p81 = scmp.ne.s32.totalorder %s70, %s71
    %p82 = scmp.eq.s32.totalorder %s15, 0
    %p83 = por %p81, %p82
    %p84 = scmp.ne.s32.totalorder %s70, %s71
    %p85 = scmp.eq.s32.totalorder %s16, 3
    %p86 = por %p84, %p85
    %p88 = scmp.ne.s32.totalorder %s71, %s87
    %p89 = scmp.eq.s32.totalorder %s16, 0
    %p90 = por %p88, %p89
    %s91 = ssub.s32 %s10, %s17
    %p92 = scmp.eq.s32.totalorder %s91, 0
    %s94 = sadd.s32 %s93, 1
    %s95 = scalar_select %p92, %s93, %s94
    %p98 = pneg %p92
    %p99 = scmp.eq.s32.totalorder %s10, 3
    %p100 = por %p98, %p99
    %p101 = scmp.ne.s32.totalorder %s93, %s96
    %p102 = scmp.eq.s32.totalorder %s10, 0
    %p103 = por %p101, %p102
    %p104 = scmp.ne.s32.totalorder %s93, %s96
    %p105 = scmp.eq.s32.totalorder %s15, 3
    %p106 = por %p104, %p105
    %p107 = scmp.ne.s32.totalorder %s96, %s97
    %p108 = scmp.eq.s32.totalorder %s15, 0
    %p109 = por %p107, %p108
    %p110 = scmp.ne.s32.totalorder %s96, %s97
    %p111 = scmp.eq.s32.totalorder %s16, 3
    %p112 = por %p110, %p111
    %p114 = scmp.ne.s32.totalorder %s97, %s113
    %p115 = scmp.eq.s32.totalorder %s16, 0
    %p116 = por %p114, %p115
    %p117 = scmp.le.s32.totalorder 1, %s10
    %p118 = scmp.lt.s32.totalorder %s10, 5
    %p119 = pnand %p117, %p118
    %p120 = pneg %p119
    // Predicated region
    $region9: #{lenet_enc.4} parent=5 // pred_check
      _
    $region10: #{lenet_enc.4} parent=5 // pred_check_branch
      %122 = sbr.rel (%p119) target = $region12
    $region11: #{lenet_enc.4} parent=5 // pred_region
      %s123 = ssub.s32 %s10, 1
      // Predicated region
      $region13: #{lenet_enc.4} parent=11 // pred_check
        %p124 = pneg %p57
      $region14: #{lenet_enc.4} parent=11 // pred_check_branch
        %126 = sbr.rel (%p124) target = $region16
      $region15: #{lenet_enc.4} parent=11 // pred_region
        _
      $region16: #{lenet_enc.4} parent=11 // pred_fallthru
        _
    $region12: #{lenet_enc.4} parent=5 // pred_fallthru
      _
    %p127 = scmp.lt.s32.totalorder %s10, 4
    // Predicated region
    $region17: #{lenet_enc.4} parent=5 // pred_check
      %p128 = pneg %p127
    $region18: #{lenet_enc.4} parent=5 // pred_check_branch
      %130 = sbr.rel (%p128) target = $region20
    $region19: #{lenet_enc.4} parent=5 // pred_region
      // Predicated region
      $region21: #{lenet_enc.4} parent=19 // pred_check
        %p131 = pneg %p30
      $region22: #{lenet_enc.4} parent=19 // pred_check_branch
        %133 = sbr.rel (%p131) target = $region24
      $region23: #{lenet_enc.4} parent=19 // pred_region
        %s134 = smul.u32 64, %s10
        %p135 = scmp.lt.s32.totalorder %s134, 255
        %s136 = scalar_select %p135, %s134, 255
        %s137 = smul.addr %s136, 4
        %s138 = scalar_lea.vmem %s0, %s137
        %s139 = smul.u32 64, %s10
      $region24: #{lenet_enc.4} parent=19 // pred_fallthru
        _
    $region20: #{lenet_enc.4} parent=5 // pred_fallthru
      _
    %p140 = scmp.le.s32.totalorder 1, %s10
    %p141 = scmp.lt.s32.totalorder %s10, 5
    %p142 = pnand %p140, %p141
    %p143 = pneg %p142
    // Predicated region
    $region25: #{lenet_enc.4} parent=5 // pred_check
      _
    $region26: #{lenet_enc.4} parent=5 // pred_check_branch
      %145 = sbr.rel (%p142) target = $region28
    $region27: #{lenet_enc.4} parent=5 // pred_region
      %s146 = ssub.s32 %s10, 1
      %s147 = smul.u32 64, %s15
      %p148 = scmp.lt.s32.totalorder %s147, 255
      %s149 = scalar_select %p148, %s147, 255
      %s150 = smul.addr %s149, 4
      %s151 = scalar_lea.vmem %s0, %s150
      %p152 = pneg %p36
      %p153 = pneg %p33
      %p154 = pneg %p57
      %p155 = pneg %p54
      %p156 = pneg %p83
      %p157 = pneg %p80
      %s158 = smul.u32 64, %s15
      %p159 = scmp.lt.s32.totalorder %s158, 255
      %s160 = scalar_select %p159, %s158, 255
      %s161 = smul.addr %s160, 8
      %s162 = scalar_lea.vmem %s2, %s161
      %p163 = pneg %p109
      %p164 = pneg %p106
      %p165 = scmp.lt.s32.totalorder %s15, 3
      %s166 = scalar_select %p165, %s15, 3
      %s167 = smul.addr %s166, 2
      %s168 = scalar_lea.vmem %s3, %s167
      %s169 = smul.u32 64, %s15
      %p170 = scmp.lt.s32.totalorder %s169, 255
      %s171 = scalar_select %p170, %s169, 255
      %s172 = smul.addr %s171, 4
      %s173 = scalar_lea.vmem %s0, %s172
      %s174 = smul.u32 64, %s15
      %s175 = smul.u32 64, %s15
      %p176 = scmp.lt.s32.totalorder %s175, 255
      %s177 = scalar_select %p176, %s175, 255
      %s178 = smul.addr %s177, 8
      %s179 = scalar_lea.vmem %s2, %s178
      %s180 = smul.u32 64, %s15
      %p181 = scmp.lt.s32.totalorder %s15, 3
      %s182 = scalar_select %p181, %s15, 3
      %s183 = smul.addr %s182, 2
      %s184 = scalar_lea.vmem %s3, %s183
      %v186 = vld [vmem:[%s173] sm:$0xf]
      %v187 = vld [vmem:[%s173 + $0x4] sm:$0xf]
      %v188 = vld [vmem:[%s173 + $0x8] sm:$0xf]
      %v189 = vld [vmem:[%s173 + $0xc] sm:$0xf]
      %v190 = vld [vmem:[%s173 + $0x10] sm:$0xf]
      %v191 = vld [vmem:[%s173 + $0x14] sm:$0xf]
      %v192 = vld [vmem:[%s173 + $0x18] sm:$0xf]
      %v193 = vld [vmem:[%s173 + $0x1c] sm:$0xf]
      %v194 = vld [vmem:[%s173 + $0x20] sm:$0xf]
      %v195 = vld [vmem:[%s173 + $0x24] sm:$0xf]
      %v196 = vld [vmem:[%s173 + $0x28] sm:$0xf]
      %v197 = vld [vmem:[%s173 + $0x2c] sm:$0xf]
      %v198 = vld [vmem:[%s173 + $0x30] sm:$0xf]
      %v199 = vld [vmem:[%s173 + $0x34] sm:$0xf]
      %v200 = vld [vmem:[%s173 + $0x38] sm:$0xf]
      %v201 = vld [vmem:[%s173 + $0x3c] sm:$0xf]
      %v202 = vld [vmem:[%s173 + $0x40] sm:$0xf]
      %v203 = vld [vmem:[%s173 + $0x44] sm:$0xf]
      %v204 = vld [vmem:[%s173 + $0x48] sm:$0xf]
      %v205 = vld [vmem:[%s173 + $0x4c] sm:$0xf]
      %v206 = vld [vmem:[%s173 + $0x50] sm:$0xf]
      %v207 = vld [vmem:[%s173 + $0x54] sm:$0xf]
      %v208 = vld [vmem:[%s173 + $0x58] sm:$0xf]
      %v209 = vld [vmem:[%s173 + $0x5c] sm:$0xf]
      %v210 = vld [vmem:[%s173 + $0x60] sm:$0xf]
      %v211 = vld [vmem:[%s173 + $0x64] sm:$0xf]
      %v212 = vld [vmem:[%s173 + $0x68] sm:$0xf]
      %v213 = vld [vmem:[%s173 + $0x6c] sm:$0xf]
      %v214 = vld [vmem:[%s173 + $0x70] sm:$0xf]
      %v215 = vld [vmem:[%s173 + $0x74] sm:$0xf]
      %v216 = vld [vmem:[%s173 + $0x78] sm:$0xf]
      %v217 = vld [vmem:[%s173 + $0x7c] sm:$0xf]
      %v218 = vld [vmem:[%s173 + $0x80] sm:$0xf]
      %v219 = vld [vmem:[%s173 + $0x84] sm:$0xf]
      %v220 = vld [vmem:[%s173 + $0x88] sm:$0xf]
      %v221 = vld [vmem:[%s173 + $0x8c] sm:$0xf]
      %v222 = vld [vmem:[%s173 + $0x90] sm:$0xf]
      %v223 = vld [vmem:[%s173 + $0x94] sm:$0xf]
      %v224 = vld [vmem:[%s173 + $0x98] sm:$0xf]
      %v225 = vld [vmem:[%s173 + $0x9c] sm:$0xf]
      %v226 = vld [vmem:[%s173 + $0xa0] sm:$0xf]
      %v227 = vld [vmem:[%s173 + $0xa4] sm:$0xf]
      %v228 = vld [vmem:[%s173 + $0xa8] sm:$0xf]
      %v229 = vld [vmem:[%s173 + $0xac] sm:$0xf]
      %v230 = vld [vmem:[%s173 + $0xb0] sm:$0xf]
      %v231 = vld [vmem:[%s173 + $0xb4] sm:$0xf]
      %v232 = vld [vmem:[%s173 + $0xb8] sm:$0xf]
      %v233 = vld [vmem:[%s173 + $0xbc] sm:$0xf]
      %v234 = vld [vmem:[%s173 + $0xc0] sm:$0xf]
      %v235 = vld [vmem:[%s173 + $0xc4] sm:$0xf]
      %v236 = vld [vmem:[%s173 + $0xc8] sm:$0xf]
      %v237 = vld [vmem:[%s173 + $0xcc] sm:$0xf]
      %v238 = vld [vmem:[%s173 + $0xd0] sm:$0xf]
      %v239 = vld [vmem:[%s173 + $0xd4] sm:$0xf]
      %v240 = vld [vmem:[%s173 + $0xd8] sm:$0xf]
      %v241 = vld [vmem:[%s173 + $0xdc] sm:$0xf]
      %v242 = vld [vmem:[%s173 + $0xe0] sm:$0xf]
      %v243 = vld [vmem:[%s173 + $0xe4] sm:$0xf]
      %v244 = vld [vmem:[%s173 + $0xe8] sm:$0xf]
      %v245 = vld [vmem:[%s173 + $0xec] sm:$0xf]
      %v246 = vld [vmem:[%s173 + $0xf0] sm:$0xf]
      %v247 = vld [vmem:[%s173 + $0xf4] sm:$0xf]
      %v248 = vld [vmem:[%s173 + $0xf8] sm:$0xf]
      %v249 = vld [vmem:[%s173 + $0xfc] sm:$0xf]
      %v250 = vld [vmem:[%s1] sm:$0xf]
      %v251 = vld [vmem:[%s1 + $0x4] sm:$0xf]
      %v252 = vld [vmem:[%s1 + $0x8] sm:$0xf]
      %v253 = vld [vmem:[%s1 + $0xc] sm:$0x1]
      %v318 = vunpack.c.l.b16 %v186
      %v319 = vunpack.c.l.b16 %v187
      %v320 = vunpack.c.l.b16 %v188
      %v321 = vunpack.c.l.b16 %v189
      %v322 = vunpack.c.l.b16 %v190
      %v323 = vunpack.c.l.b16 %v191
      %v324 = vunpack.c.l.b16 %v192
      %v325 = vunpack.c.l.b16 %v193
      %v326 = vunpack.c.l.b16 %v194
      %v327 = vunpack.c.l.b16 %v195
      %v328 = vunpack.c.l.b16 %v196
      %v329 = vunpack.c.l.b16 %v197
      %v330 = vunpack.c.l.b16 %v198
      %v331 = vunpack.c.l.b16 %v199
      %v332 = vunpack.c.l.b16 %v200
      %v333 = vunpack.c.l.b16 %v201
      %v334 = vunpack.c.l.b16 %v202
      %v335 = vunpack.c.l.b16 %v203
      %v336 = vunpack.c.l.b16 %v204
      %v337 = vunpack.c.l.b16 %v205
      %v338 = vunpack.c.l.b16 %v206
      %v339 = vunpack.c.l.b16 %v207
      %v340 = vunpack.c.l.b16 %v208
      %v341 = vunpack.c.l.b16 %v209
      %v342 = vunpack.c.l.b16 %v210
      %v343 = vunpack.c.l.b16 %v211
      %v344 = vunpack.c.l.b16 %v212
      %v345 = vunpack.c.l.b16 %v213
      %v346 = vunpack.c.l.b16 %v214
      %v347 = vunpack.c.l.b16 %v215
      %v348 = vunpack.c.l.b16 %v216
      %v349 = vunpack.c.l.b16 %v217
      %v350 = vunpack.c.l.b16 %v218
      %v351 = vunpack.c.l.b16 %v219
      %v352 = vunpack.c.l.b16 %v220
      %v353 = vunpack.c.l.b16 %v221
      %v354 = vunpack.c.l.b16 %v222
      %v355 = vunpack.c.l.b16 %v223
      %v356 = vunpack.c.l.b16 %v224
      %v357 = vunpack.c.l.b16 %v225
      %v358 = vunpack.c.l.b16 %v226
      %v359 = vunpack.c.l.b16 %v227
      %v360 = vunpack.c.l.b16 %v228
      %v361 = vunpack.c.l.b16 %v229
      %v362 = vunpack.c.l.b16 %v230
      %v363 = vunpack.c.l.b16 %v231
      %v364 = vunpack.c.l.b16 %v232
      %v365 = vunpack.c.l.b16 %v233
      %v366 = vunpack.c.l.b16 %v234
      %v367 = vunpack.c.l.b16 %v235
      %v368 = vunpack.c.l.b16 %v236
      %v369 = vunpack.c.l.b16 %v237
      %v370 = vunpack.c.l.b16 %v238
      %v371 = vunpack.c.l.b16 %v239
      %v372 = vunpack.c.l.b16 %v240
      %v373 = vunpack.c.l.b16 %v241
      %v374 = vunpack.c.l.b16 %v242
      %v375 = vunpack.c.l.b16 %v243
      %v376 = vunpack.c.l.b16 %v244
      %v377 = vunpack.c.l.b16 %v245
      %v378 = vunpack.c.l.b16 %v246
      %v379 = vunpack.c.l.b16 %v247
      %v380 = vunpack.c.l.b16 %v248
      %v381 = vunpack.c.l.b16 %v249
      %v382 = vpack.c.b16 %v319, %v318
      %v383 = vpack.c.b16 %v321, %v320
      %v384 = vpack.c.b16 %v323, %v322
      %v385 = vpack.c.b16 %v325, %v324
      %v386 = vpack.c.b16 %v327, %v326
      %v387 = vpack.c.b16 %v329, %v328
      %v388 = vpack.c.b16 %v331, %v330
      %v389 = vpack.c.b16 %v333, %v332
      %v390 = vpack.c.b16 %v335, %v334
      %v391 = vpack.c.b16 %v337, %v336
      %v392 = vpack.c.b16 %v339, %v338
      %v393 = vpack.c.b16 %v341, %v340
      %v394 = vpack.c.b16 %v343, %v342
      %v395 = vpack.c.b16 %v345, %v344
      %v396 = vpack.c.b16 %v347, %v346
      %v397 = vpack.c.b16 %v349, %v348
      %v398 = vpack.c.b16 %v351, %v350
      %v399 = vpack.c.b16 %v353, %v352
      %v400 = vpack.c.b16 %v355, %v354
      %v401 = vpack.c.b16 %v357, %v356
      %v402 = vpack.c.b16 %v359, %v358
      %v403 = vpack.c.b16 %v361, %v360
      %v404 = vpack.c.b16 %v363, %v362
      %v405 = vpack.c.b16 %v365, %v364
      %v406 = vpack.c.b16 %v367, %v366
      %v407 = vpack.c.b16 %v369, %v368
      %v408 = vpack.c.b16 %v371, %v370
      %v409 = vpack.c.b16 %v373, %v372
      %v410 = vpack.c.b16 %v375, %v374
      %v411 = vpack.c.b16 %v377, %v376
      %v412 = vpack.c.b16 %v379, %v378
      %v413 = vpack.c.b16 %v381, %v380
      %v418 = vunpack.c.l.b16 %v250
      %v419 = vunpack.c.l.b16 %v251
      %v420 = vunpack.c.l.b16 %v252
      %v421 = vunpack.c.l.b16 %v253
      %v422 = vpack.c.b16 %v419, %v418
      %v423 = vpack.c.b16 %v421, %v420
      %vm425 = vcmask 203776
      %v427 = vsel %vm425, %v382, 0
      %v430 = vsel %vm425, %v383, 0
      %v433 = vsel %vm425, %v384, 0
      %v436 = vsel %vm425, %v385, 0
      %v439 = vsel %vm425, %v386, 0
      %v442 = vsel %vm425, %v387, 0
      %v445 = vsel %vm425, %v388, 0
      %v448 = vsel %vm425, %v389, 0
      %v451 = vsel %vm425, %v390, 0
      %v454 = vsel %vm425, %v391, 0
      %v457 = vsel %vm425, %v392, 0
      %v460 = vsel %vm425, %v393, 0
      %v463 = vsel %vm425, %v394, 0
      %v466 = vsel %vm425, %v395, 0
      %v469 = vsel %vm425, %v396, 0
      %v472 = vsel %vm425, %v397, 0
      %v475 = vsel %vm425, %v398, 0
      %v478 = vsel %vm425, %v399, 0
      %v481 = vsel %vm425, %v400, 0
      %v484 = vsel %vm425, %v401, 0
      %v487 = vsel %vm425, %v402, 0
      %v490 = vsel %vm425, %v403, 0
      %v493 = vsel %vm425, %v404, 0
      %v496 = vsel %vm425, %v405, 0
      %v499 = vsel %vm425, %v406, 0
      %v502 = vsel %vm425, %v407, 0
      %v505 = vsel %vm425, %v408, 0
      %v508 = vsel %vm425, %v409, 0
      %v511 = vsel %vm425, %v410, 0
      %v514 = vsel %vm425, %v411, 0
      %v517 = vsel %vm425, %v412, 0
      %v520 = vsel %vm425, %v413, 0
      %vm522 = vcmask 1043456
      %vm523 = vcmask 1044480
      %v524 = vsel %vm522, 4294967295, 65535
      %v525 = vsel %vm523, %v524, 0
      %v527 = vand.u32 %v423, %v525
      %529 = vmatprep.subr.bf16.mxu0 0
      %530 = vmatpush1.bf16.msra.mxu0 %v422
      %531 = vmatprep.subr.bf16.mxu0 0
      %532 = vmatpush1.bf16.msra.mxu0 %v527
      %533 = vmatprep.subr.bf16.mxu0 0
      %534 = vmatpush1.bf16.msra.mxu0 0
      %535 = vmatprep.subr.bf16.mxu0 0
      %536 = vmatpush1.bf16.msra.mxu0 0
      %537 = vmatprep.subr.bf16.mxu0 0
      %538 = vmatpush1.bf16.msra.mxu0 0
      %539 = vmatprep.subr.bf16.mxu0 0
      %540 = vmatpush1.bf16.msra.mxu0 0
      %541 = vmatprep.subr.bf16.mxu0 0
      %542 = vmatpush1.bf16.msra.mxu0 0
      %543 = vmatprep.subr.bf16.mxu0 0
      %544 = vmatpush1.bf16.msra.mxu0 0
      %545 = vmatprep.subr.bf16.mxu0 0
      %546 = vmatpush1.bf16.msra.mxu0 0
      %547 = vmatprep.subr.bf16.mxu0 0
      %548 = vmatpush1.bf16.msra.mxu0 0
      %549 = vmatprep.subr.bf16.mxu0 0
      %550 = vmatpush1.bf16.msra.mxu0 0
      %551 = vmatprep.subr.bf16.mxu0 0
      %552 = vmatpush1.bf16.msra.mxu0 0
      %553 = vmatprep.subr.bf16.mxu0 0
      %554 = vmatpush1.bf16.msra.mxu0 0
      %555 = vmatprep.subr.bf16.mxu0 0
      %556 = vmatpush1.bf16.msra.mxu0 0
      %557 = vmatprep.subr.bf16.mxu0 0
      %558 = vmatpush1.bf16.msra.mxu0 0
      %559 = vmatprep.subr.bf16.mxu0 0
      %560 = vmatpush1.bf16.msra.mxu0 0
      %561 = vmatprep.mubr.bf16.mxu0 0
      %562 = vmatmul.mubr.bf16.gmra.mrb[0].mxu0 %v427
      %v563 = vpop.f32.mrb[0].mxu0
      %v564 = vadd.f32 0.0, %v563
      %v565 = vpop.f32.mrb[0].mxu0
      %v566 = vpop.f32.mrb[0].mxu0
      %v567 = vadd.f32 0.0, %v566
      %v568 = vpop.f32.mrb[0].mxu0
      %569 = vmatprep.mubr.bf16.mxu0 0
      %570 = vmatmul.mubr.bf16.gmra.mrb[0].mxu0 %v430
      %v571 = vpop.f32.mrb[0].mxu0
      %v572 = vadd.f32 0.0, %v571
      %v573 = vpop.f32.mrb[0].mxu0
      %v574 = vpop.f32.mrb[0].mxu0
      %v575 = vadd.f32 0.0, %v574
      %v576 = vpop.f32.mrb[0].mxu0
      %577 = vmatprep.mubr.bf16.mxu0 0
      %578 = vmatmul.mubr.bf16.gmra.mrb[0].mxu0 %v433
      %v579 = vpop.f32.mrb[0].mxu0
      %v580 = vadd.f32 0.0, %v579
      %v581 = vpop.f32.mrb[0].mxu0
      %v582 = vpop.f32.mrb[0].mxu0
      %v583 = vadd.f32 0.0, %v582
      %v584 = vpop.f32.mrb[0].mxu0
      %585 = vmatprep.mubr.bf16.mxu0 0
      %586 = vmatmul.mubr.bf16.gmra.mrb[0].mxu0 %v436
      %v587 = vpop.f32.mrb[0].mxu0
      %v588 = vadd.f32 0.0, %v587
      %v589 = vpop.f32.mrb[0].mxu0
      %v590 = vpop.f32.mrb[0].mxu0
      %v591 = vadd.f32 0.0, %v590
      %v592 = vpop.f32.mrb[0].mxu0
      %593 = vmatprep.mubr.bf16.mxu0 0
      %594 = vmatmul.mubr.bf16.gmra.mrb[0].mxu0 %v439
      %v595 = vpop.f32.mrb[0].mxu0
      %v596 = vadd.f32 0.0, %v595
      %v597 = vpop.f32.mrb[0].mxu0
      %v598 = vpop.f32.mrb[0].mxu0
      %v599 = vadd.f32 0.0, %v598
      %v600 = vpop.f32.mrb[0].mxu0
      %601 = vmatprep.mubr.bf16.mxu0 0
      %602 = vmatmul.mubr.bf16.gmra.mrb[0].mxu0 %v442
      %v603 = vpop.f32.mrb[0].mxu0
      %v604 = vadd.f32 0.0, %v603
      %v605 = vpop.f32.mrb[0].mxu0
      %v606 = vpop.f32.mrb[0].mxu0
      %v607 = vadd.f32 0.0, %v606
      %v608 = vpop.f32.mrb[0].mxu0
      %609 = vmatprep.mubr.bf16.mxu0 0
      %610 = vmatmul.mubr.bf16.gmra.mrb[0].mxu0 %v445
      %v611 = vpop.f32.mrb[0].mxu0
      %v612 = vadd.f32 0.0, %v611
      %v613 = vpop.f32.mrb[0].mxu0
      %v614 = vpop.f32.mrb[0].mxu0
      %v615 = vadd.f32 0.0, %v614
      %v616 = vpop.f32.mrb[0].mxu0
      %617 = vmatprep.mubr.bf16.mxu0 0
      %618 = vmatmul.mubr.bf16.gmra.mrb[0].mxu0 %v448
      %v619 = vpop.f32.mrb[0].mxu0
      %v620 = vadd.f32 0.0, %v619
      %v621 = vpop.f32.mrb[0].mxu0
      %v622 = vpop.f32.mrb[0].mxu0
      %v623 = vadd.f32 0.0, %v622
      %v624 = vpop.f32.mrb[0].mxu0
      %625 = vmatprep.mubr.bf16.mxu0 0
      %626 = vmatmul.mubr.bf16.gmra.mrb[0].mxu0 %v451
      %v627 = vpop.f32.mrb[0].mxu0
      %v628 = vadd.f32 0.0, %v627
      %v629 = vpop.f32.mrb[0].mxu0
      %v630 = vpop.f32.mrb[0].mxu0
      %v631 = vadd.f32 0.0, %v630
      %v632 = vpop.f32.mrb[0].mxu0
      %633 = vmatprep.mubr.bf16.mxu0 0
      %634 = vmatmul.mubr.bf16.gmra.mrb[0].mxu0 %v454
      %v635 = vpop.f32.mrb[0].mxu0
      %v636 = vadd.f32 0.0, %v635
      %v637 = vpop.f32.mrb[0].mxu0
      %v638 = vpop.f32.mrb[0].mxu0
      %v639 = vadd.f32 0.0, %v638
      %v640 = vpop.f32.mrb[0].mxu0
      %641 = vmatprep.mubr.bf16.mxu0 0
      %642 = vmatmul.mubr.bf16.gmra.mrb[0].mxu0 %v457
      %v643 = vpop.f32.mrb[0].mxu0
      %v644 = vadd.f32 0.0, %v643
      %v645 = vpop.f32.mrb[0].mxu0
      %v646 = vpop.f32.mrb[0].mxu0
      %v647 = vadd.f32 0.0, %v646
      %v648 = vpop.f32.mrb[0].mxu0
      %649 = vmatprep.mubr.bf16.mxu0 0
      %650 = vmatmul.mubr.bf16.gmra.mrb[0].mxu0 %v460
      %v651 = vpop.f32.mrb[0].mxu0
      %v652 = vadd.f32 0.0, %v651
      %v653 = vpop.f32.mrb[0].mxu0
      %v654 = vpop.f32.mrb[0].mxu0
      %v655 = vadd.f32 0.0, %v654
      %v656 = vpop.f32.mrb[0].mxu0
      %657 = vmatprep.mubr.bf16.mxu0 0
      %658 = vmatmul.mubr.bf16.gmra.mrb[0].mxu0 %v463
      %v659 = vpop.f32.mrb[0].mxu0
      %v660 = vadd.f32 0.0, %v659
      %v661 = vpop.f32.mrb[0].mxu0
      %v662 = vpop.f32.mrb[0].mxu0
      %v663 = vadd.f32 0.0, %v662
      %v664 = vpop.f32.mrb[0].mxu0
      %665 = vmatprep.mubr.bf16.mxu0 0
      %666 = vmatmul.mubr.bf16.gmra.mrb[0].mxu0 %v466
      %v667 = vpop.f32.mrb[0].mxu0
      %v668 = vadd.f32 0.0, %v667
      %v669 = vpop.f32.mrb[0].mxu0
      %v670 = vpop.f32.mrb[0].mxu0
      %v671 = vadd.f32 0.0, %v670
      %v672 = vpop.f32.mrb[0].mxu0
      %673 = vmatprep.mubr.bf16.mxu0 0
      %674 = vmatmul.mubr.bf16.gmra.mrb[0].mxu0 %v469
      %v675 = vpop.f32.mrb[0].mxu0
      %v676 = vadd.f32 0.0, %v675
      %v677 = vpop.f32.mrb[0].mxu0
      %v678 = vpop.f32.mrb[0].mxu0
      %v679 = vadd.f32 0.0, %v678
      %v680 = vpop.f32.mrb[0].mxu0
      %681 = vmatprep.mubr.bf16.mxu0 0
      %682 = vmatmul.mubr.bf16.gmra.mrb[0].mxu0 %v472
      %v683 = vpop.f32.mrb[0].mxu0
      %v684 = vadd.f32 0.0, %v683
      %v685 = vpop.f32.mrb[0].mxu0
      %v686 = vpop.f32.mrb[0].mxu0
      %v687 = vadd.f32 0.0, %v686
      %v688 = vpop.f32.mrb[0].mxu0
      %689 = vmatprep.mubr.bf16.mxu0 0
      %690 = vmatmul.mubr.bf16.gmra.mrb[0].mxu0 %v475
      %v691 = vpop.f32.mrb[0].mxu0
      %v692 = vadd.f32 0.0, %v691
      %v693 = vpop.f32.mrb[0].mxu0
      %v694 = vpop.f32.mrb[0].mxu0
      %v695 = vadd.f32 0.0, %v694
      %v696 = vpop.f32.mrb[0].mxu0
      %697 = vmatprep.mubr.bf16.mxu0 0
      %698 = vmatmul.mubr.bf16.gmra.mrb[0].mxu0 %v478
      %v699 = vpop.f32.mrb[0].mxu0
      %v700 = vadd.f32 0.0, %v699
      %v701 = vpop.f32.mrb[0].mxu0
      %v702 = vpop.f32.mrb[0].mxu0
      %v703 = vadd.f32 0.0, %v702
      %v704 = vpop.f32.mrb[0].mxu0
      %705 = vmatprep.mubr.bf16.mxu0 0
      %706 = vmatmul.mubr.bf16.gmra.mrb[0].mxu0 %v481
      %v707 = vpop.f32.mrb[0].mxu0
      %v708 = vadd.f32 0.0, %v707
      %v709 = vpop.f32.mrb[0].mxu0
      %v710 = vpop.f32.mrb[0].mxu0
      %v711 = vadd.f32 0.0, %v710
      %v712 = vpop.f32.mrb[0].mxu0
      %713 = vmatprep.mubr.bf16.mxu0 0
      %714 = vmatmul.mubr.bf16.gmra.mrb[0].mxu0 %v484
      %v715 = vpop.f32.mrb[0].mxu0
      %v716 = vadd.f32 0.0, %v715
      %v717 = vpop.f32.mrb[0].mxu0
      %v718 = vpop.f32.mrb[0].mxu0
      %v719 = vadd.f32 0.0, %v718
      %v720 = vpop.f32.mrb[0].mxu0
      %721 = vmatprep.mubr.bf16.mxu0 0
      %722 = vmatmul.mubr.bf16.gmra.mrb[0].mxu0 %v487
      %v723 = vpop.f32.mrb[0].mxu0
      %v724 = vadd.f32 0.0, %v723
      %v725 = vpop.f32.mrb[0].mxu0
      %v726 = vpop.f32.mrb[0].mxu0
      %v727 = vadd.f32 0.0, %v726
      %v728 = vpop.f32.mrb[0].mxu0
      %729 = vmatprep.mubr.bf16.mxu0 0
      %730 = vmatmul.mubr.bf16.gmra.mrb[0].mxu0 %v490
      %v731 = vpop.f32.mrb[0].mxu0
      %v732 = vadd.f32 0.0, %v731
      %v733 = vpop.f32.mrb[0].mxu0
      %v734 = vpop.f32.mrb[0].mxu0
      %v735 = vadd.f32 0.0, %v734
      %v736 = vpop.f32.mrb[0].mxu0
      %737 = vmatprep.mubr.bf16.mxu0 0
      %738 = vmatmul.mubr.bf16.gmra.mrb[0].mxu0 %v493
      %v739 = vpop.f32.mrb[0].mxu0
      %v740 = vadd.f32 0.0, %v739
      %v741 = vpop.f32.mrb[0].mxu0
      %v742 = vpop.f32.mrb[0].mxu0
      %v743 = vadd.f32 0.0, %v742
      %v744 = vpop.f32.mrb[0].mxu0
      %745 = vmatprep.mubr.bf16.mxu0 0
      %746 = vmatmul.mubr.bf16.gmra.mrb[0].mxu0 %v496
      %v747 = vpop.f32.mrb[0].mxu0
      %v748 = vadd.f32 0.0, %v747
      %v749 = vpop.f32.mrb[0].mxu0
      %v750 = vpop.f32.mrb[0].mxu0
      %v751 = vadd.f32 0.0, %v750
      %v752 = vpop.f32.mrb[0].mxu0
      %753 = vmatprep.mubr.bf16.mxu0 0
      %754 = vmatmul.mubr.bf16.gmra.mrb[0].mxu0 %v499
      %v755 = vpop.f32.mrb[0].mxu0
      %v756 = vadd.f32 0.0, %v755
      %v757 = vpop.f32.mrb[0].mxu0
      %v758 = vpop.f32.mrb[0].mxu0
      %v759 = vadd.f32 0.0, %v758
      %v760 = vpop.f32.mrb[0].mxu0
      %761 = vmatprep.mubr.bf16.mxu0 0
      %762 = vmatmul.mubr.bf16.gmra.mrb[0].mxu0 %v502
      %v763 = vpop.f32.mrb[0].mxu0
      %v764 = vadd.f32 0.0, %v763
      %v765 = vpop.f32.mrb[0].mxu0
      %v766 = vpop.f32.mrb[0].mxu0
      %v767 = vadd.f32 0.0, %v766
      %v768 = vpop.f32.mrb[0].mxu0
      %769 = vmatprep.mubr.bf16.mxu0 0
      %770 = vmatmul.mubr.bf16.gmra.mrb[0].mxu0 %v505
      %v771 = vpop.f32.mrb[0].mxu0
      %v772 = vadd.f32 0.0, %v771
      %v773 = vpop.f32.mrb[0].mxu0
      %v774 = vpop.f32.mrb[0].mxu0
      %v775 = vadd.f32 0.0, %v774
      %v776 = vpop.f32.mrb[0].mxu0
      %777 = vmatprep.mubr.bf16.mxu0 0
      %778 = vmatmul.mubr.bf16.gmra.mrb[0].mxu0 %v508
      %v779 = vpop.f32.mrb[0].mxu0
      %v780 = vadd.f32 0.0, %v779
      %v781 = vpop.f32.mrb[0].mxu0
      %v782 = vpop.f32.mrb[0].mxu0
      %v783 = vadd.f32 0.0, %v782
      %v784 = vpop.f32.mrb[0].mxu0
      %785 = vmatprep.mubr.bf16.mxu0 0
      %786 = vmatmul.mubr.bf16.gmra.mrb[0].mxu0 %v511
      %v787 = vpop.f32.mrb[0].mxu0
      %v788 = vadd.f32 0.0, %v787
      %v789 = vpop.f32.mrb[0].mxu0
      %v790 = vpop.f32.mrb[0].mxu0
      %v791 = vadd.f32 0.0, %v790
      %v792 = vpop.f32.mrb[0].mxu0
      %793 = vmatprep.mubr.bf16.mxu0 0
      %794 = vmatmul.mubr.bf16.gmra.mrb[0].mxu0 %v514
      %v795 = vpop.f32.mrb[0].mxu0
      %v796 = vadd.f32 0.0, %v795
      %v797 = vpop.f32.mrb[0].mxu0
      %v798 = vpop.f32.mrb[0].mxu0
      %v799 = vadd.f32 0.0, %v798
      %v800 = vpop.f32.mrb[0].mxu0
      %801 = vmatprep.mubr.bf16.mxu0 0
      %802 = vmatmul.mubr.bf16.gmra.mrb[0].mxu0 %v517
      %v803 = vpop.f32.mrb[0].mxu0
      %v804 = vadd.f32 0.0, %v803
      %v805 = vpop.f32.mrb[0].mxu0
      %v806 = vpop.f32.mrb[0].mxu0
      %v807 = vadd.f32 0.0, %v806
      %v808 = vpop.f32.mrb[0].mxu0
      %809 = vmatprep.mubr.bf16.mxu0 0
      %810 = vmatmul.mubr.bf16.gmra.mrb[0].mxu0 %v520
      %v811 = vpop.f32.mrb[0].mxu0
      %v812 = vadd.f32 0.0, %v811
      %v813 = vpop.f32.mrb[0].mxu0
      %v814 = vpop.f32.mrb[0].mxu0
      %v815 = vadd.f32 0.0, %v814
      %v816 = vpop.f32.mrb[0].mxu0
      %817 = vdwg.mxu0
      %818 = vst [vmem:[%s179] sm:$0xff] %v564
      %819 = vst [vmem:[%s179 + $0x8] sm:$0xff] %v567
      %820 = vst [vmem:[%s179 + $0x10] sm:$0xff] %v572
      %821 = vst [vmem:[%s179 + $0x18] sm:$0xff] %v575
      %822 = vst [vmem:[%s179 + $0x20] sm:$0xff] %v580
      %823 = vst [vmem:[%s179 + $0x28] sm:$0xff] %v583
      %824 = vst [vmem:[%s179 + $0x30] sm:$0xff] %v588
      %825 = vst [vmem:[%s179 + $0x38] sm:$0xff] %v591
      %826 = vst [vmem:[%s179 + $0x40] sm:$0xff] %v596
      %827 = vst [vmem:[%s179 + $0x48] sm:$0xff] %v599
      %828 = vst [vmem:[%s179 + $0x50] sm:$0xff] %v604
      %829 = vst [vmem:[%s179 + $0x58] sm:$0xff] %v607
      %830 = vst [vmem:[%s179 + $0x60] sm:$0xff] %v612
      %831 = vst [vmem:[%s179 + $0x68] sm:$0xff] %v615
      %832 = vst [vmem:[%s179 + $0x70] sm:$0xff] %v620
      %833 = vst [vmem:[%s179 + $0x78] sm:$0xff] %v623
      %834 = vst [vmem:[%s179 + $0x80] sm:$0xff] %v628
      %835 = vst [vmem:[%s179 + $0x88] sm:$0xff] %v631
      %836 = vst [vmem:[%s179 + $0x90] sm:$0xff] %v636
      %837 = vst [vmem:[%s179 + $0x98] sm:$0xff] %v639
      %838 = vst [vmem:[%s179 + $0xa0] sm:$0xff] %v644
      %839 = vst [vmem:[%s179 + $0xa8] sm:$0xff] %v647
      %840 = vst [vmem:[%s179 + $0xb0] sm:$0xff] %v652
      %841 = vst [vmem:[%s179 + $0xb8] sm:$0xff] %v655
      %842 = vst [vmem:[%s179 + $0xc0] sm:$0xff] %v660
      %843 = vst [vmem:[%s179 + $0xc8] sm:$0xff] %v663
      %844 = vst [vmem:[%s179 + $0xd0] sm:$0xff] %v668
      %845 = vst [vmem:[%s179 + $0xd8] sm:$0xff] %v671
      %846 = vst [vmem:[%s179 + $0xe0] sm:$0xff] %v676
      %847 = vst [vmem:[%s179 + $0xe8] sm:$0xff] %v679
      %848 = vst [vmem:[%s179 + $0xf0] sm:$0xff] %v684
      %849 = vst [vmem:[%s179 + $0xf8] sm:$0xff] %v687
      %850 = vst [vmem:[%s179 + $0x100] sm:$0xff] %v692
      %851 = vst [vmem:[%s179 + $0x108] sm:$0xff] %v695
      %852 = vst [vmem:[%s179 + $0x110] sm:$0xff] %v700
      %853 = vst [vmem:[%s179 + $0x118] sm:$0xff] %v703
      %854 = vst [vmem:[%s179 + $0x120] sm:$0xff] %v708
      %855 = vst [vmem:[%s179 + $0x128] sm:$0xff] %v711
      %856 = vst [vmem:[%s179 + $0x130] sm:$0xff] %v716
      %857 = vst [vmem:[%s179 + $0x138] sm:$0xff] %v719
      %858 = vst [vmem:[%s179 + $0x140] sm:$0xff] %v724
      %859 = vst [vmem:[%s179 + $0x148] sm:$0xff] %v727
      %860 = vst [vmem:[%s179 + $0x150] sm:$0xff] %v732
      %861 = vst [vmem:[%s179 + $0x158] sm:$0xff] %v735
      %862 = vst [vmem:[%s179 + $0x160] sm:$0xff] %v740
      %863 = vst [vmem:[%s179 + $0x168] sm:$0xff] %v743
      %864 = vst [vmem:[%s179 + $0x170] sm:$0xff] %v748
      %865 = vst [vmem:[%s179 + $0x178] sm:$0xff] %v751
      %866 = vst [vmem:[%s179 + $0x180] sm:$0xff] %v756
      %867 = vst [vmem:[%s179 + $0x188] sm:$0xff] %v759
      %868 = vst [vmem:[%s179 + $0x190] sm:$0xff] %v764
      %869 = vst [vmem:[%s179 + $0x198] sm:$0xff] %v767
      %870 = vst [vmem:[%s179 + $0x1a0] sm:$0xff] %v772
      %871 = vst [vmem:[%s179 + $0x1a8] sm:$0xff] %v775
      %872 = vst [vmem:[%s179 + $0x1b0] sm:$0xff] %v780
      %873 = vst [vmem:[%s179 + $0x1b8] sm:$0xff] %v783
      %874 = vst [vmem:[%s179 + $0x1c0] sm:$0xff] %v788
      %875 = vst [vmem:[%s179 + $0x1c8] sm:$0xff] %v791
      %876 = vst [vmem:[%s179 + $0x1d0] sm:$0xff] %v796
      %877 = vst [vmem:[%s179 + $0x1d8] sm:$0xff] %v799
      %878 = vst [vmem:[%s179 + $0x1e0] sm:$0xff] %v804
      %879 = vst [vmem:[%s179 + $0x1e8] sm:$0xff] %v807
      %880 = vst [vmem:[%s179 + $0x1f0] sm:$0xff] %v812
      %881 = vst [vmem:[%s179 + $0x1f8] sm:$0xff] %v815
      %v882 = vadd.f32 %v564, %v567
      %v883 = vadd.f32 %v882, %v572
      %v884 = vadd.f32 %v883, %v575
      %v885 = vadd.f32 %v884, %v580
      %v886 = vadd.f32 %v885, %v583
      %v887 = vadd.f32 %v886, %v588
      %v888 = vadd.f32 %v887, %v591
      %v889 = vadd.f32 %v888, %v596
      %v890 = vadd.f32 %v889, %v599
      %v891 = vadd.f32 %v890, %v604
      %v892 = vadd.f32 %v891, %v607
      %v893 = vadd.f32 %v892, %v612
      %v894 = vadd.f32 %v893, %v615
      %v895 = vadd.f32 %v894, %v620
      %v896 = vadd.f32 %v895, %v623
      %v897 = vadd.f32 %v896, %v628
      %v898 = vadd.f32 %v897, %v631
      %v899 = vadd.f32 %v898, %v636
      %v900 = vadd.f32 %v899, %v639
      %v901 = vadd.f32 %v900, %v644
      %v902 = vadd.f32 %v901, %v647
      %v903 = vadd.f32 %v902, %v652
      %v904 = vadd.f32 %v903, %v655
      %v905 = vadd.f32 %v904, %v660
      %v906 = vadd.f32 %v905, %v663
      %v907 = vadd.f32 %v906, %v668
      %v908 = vadd.f32 %v907, %v671
      %v909 = vadd.f32 %v908, %v676
      %v910 = vadd.f32 %v909, %v679
      %v911 = vadd.f32 %v910, %v684
      %v912 = vadd.f32 %v911, %v687
      %v913 = vadd.f32 %v912, %v692
      %v914 = vadd.f32 %v913, %v695
      %v915 = vadd.f32 %v914, %v700
      %v916 = vadd.f32 %v915, %v703
      %v917 = vadd.f32 %v916, %v708
      %v918 = vadd.f32 %v917, %v711
      %v919 = vadd.f32 %v918, %v716
      %v920 = vadd.f32 %v919, %v719
      %v921 = vadd.f32 %v920, %v724
      %v922 = vadd.f32 %v921, %v727
      %v923 = vadd.f32 %v922, %v732
      %v924 = vadd.f32 %v923, %v735
      %v925 = vadd.f32 %v924, %v740
      %v926 = vadd.f32 %v925, %v743
      %v927 = vadd.f32 %v926, %v748
      %v928 = vadd.f32 %v927, %v751
      %v929 = vadd.f32 %v928, %v756
      %v930 = vadd.f32 %v929, %v759
      %v931 = vadd.f32 %v930, %v764
      %v932 = vadd.f32 %v931, %v767
      %v933 = vadd.f32 %v932, %v772
      %v934 = vadd.f32 %v933, %v775
      %v935 = vadd.f32 %v934, %v780
      %v936 = vadd.f32 %v935, %v783
      %v937 = vadd.f32 %v936, %v788
      %v938 = vadd.f32 %v937, %v791
      %v939 = vadd.f32 %v938, %v796
      %v940 = vadd.f32 %v939, %v799
      %v941 = vadd.f32 %v940, %v804
      %v942 = vadd.f32 %v941, %v807
      %v943 = vadd.f32 %v942, %v812
      %v944 = vadd.f32 %v943, %v815
      %v945 = vrot.slane %v944, 4
      %v946 = vadd.f32 %v944, %v945
      %v947 = vrot.slane %v946, 2
      %v948 = vadd.f32 %v946, %v947
      %v949 = vrot.slane %v948, 1
      %v950 = vadd.f32 %v948, %v949
      %v951 = vmul.f32 %v564, %v564
      %v952 = vmul.f32 %v567, %v567
      %v953 = vmul.f32 %v572, %v572
      %v954 = vmul.f32 %v575, %v575
      %v955 = vmul.f32 %v580, %v580
      %v956 = vmul.f32 %v583, %v583
      %v957 = vmul.f32 %v588, %v588
      %v958 = vmul.f32 %v591, %v591
      %v959 = vmul.f32 %v596, %v596
      %v960 = vmul.f32 %v599, %v599
      %v961 = vmul.f32 %v604, %v604
      %v962 = vmul.f32 %v607, %v607
      %v963 = vmul.f32 %v612, %v612
      %v964 = vmul.f32 %v615, %v615
      %v965 = vmul.f32 %v620, %v620
      %v966 = vmul.f32 %v623, %v623
      %v967 = vmul.f32 %v628, %v628
      %v968 = vmul.f32 %v631, %v631
      %v969 = vmul.f32 %v636, %v636
      %v970 = vmul.f32 %v639, %v639
      %v971 = vmul.f32 %v644, %v644
      %v972 = vmul.f32 %v647, %v647
      %v973 = vmul.f32 %v652, %v652
      %v974 = vmul.f32 %v655, %v655
      %v975 = vmul.f32 %v660, %v660
      %v976 = vmul.f32 %v663, %v663
      %v977 = vmul.f32 %v668, %v668
      %v978 = vmul.f32 %v671, %v671
      %v979 = vmul.f32 %v676, %v676
      %v980 = vmul.f32 %v679, %v679
      %v981 = vmul.f32 %v684, %v684
      %v982 = vmul.f32 %v687, %v687
      %v983 = vmul.f32 %v692, %v692
      %v984 = vmul.f32 %v695, %v695
      %v985 = vmul.f32 %v700, %v700
      %v986 = vmul.f32 %v703, %v703
      %v987 = vmul.f32 %v708, %v708
      %v988 = vmul.f32 %v711, %v711
      %v989 = vmul.f32 %v716, %v716
      %v990 = vmul.f32 %v719, %v719
      %v991 = vmul.f32 %v724, %v724
      %v992 = vmul.f32 %v727, %v727
      %v993 = vmul.f32 %v732, %v732
      %v994 = vmul.f32 %v735, %v735
      %v995 = vmul.f32 %v740, %v740
      %v996 = vmul.f32 %v743, %v743
      %v997 = vmul.f32 %v748, %v748
      %v998 = vmul.f32 %v751, %v751
      %v999 = vmul.f32 %v756, %v756
      %v1000 = vmul.f32 %v759, %v759
      %v1001 = vmul.f32 %v764, %v764
      %v1002 = vmul.f32 %v767, %v767
      %v1003 = vmul.f32 %v772, %v772
      %v1004 = vmul.f32 %v775, %v775
      %v1005 = vmul.f32 %v780, %v780
      %v1006 = vmul.f32 %v783, %v783
      %v1007 = vmul.f32 %v788, %v788
      %v1008 = vmul.f32 %v791, %v791
      %v1009 = vmul.f32 %v796, %v796
      %v1010 = vmul.f32 %v799, %v799
      %v1011 = vmul.f32 %v804, %v804
      %v1012 = vmul.f32 %v807, %v807
      %v1013 = vmul.f32 %v812, %v812
      %v1014 = vmul.f32 %v815, %v815
      %v1015 = vadd.f32 %v951, %v952
      %v1016 = vadd.f32 %v1015, %v953
      %v1017 = vadd.f32 %v1016, %v954
      %v1018 = vadd.f32 %v1017, %v955
      %v1019 = vadd.f32 %v1018, %v956
      %v1020 = vadd.f32 %v1019, %v957
      %v1021 = vadd.f32 %v1020, %v958
      %v1022 = vadd.f32 %v1021, %v959
      %v1023 = vadd.f32 %v1022, %v960
      %v1024 = vadd.f32 %v1023, %v961
      %v1025 = vadd.f32 %v1024, %v962
      %v1026 = vadd.f32 %v1025, %v963
      %v1027 = vadd.f32 %v1026, %v964
      %v1028 = vadd.f32 %v1027, %v965
      %v1029 = vadd.f32 %v1028, %v966
      %v1030 = vadd.f32 %v1029, %v967
      %v1031 = vadd.f32 %v1030, %v968
      %v1032 = vadd.f32 %v1031, %v969
      %v1033 = vadd.f32 %v1032, %v970
      %v1034 = vadd.f32 %v1033, %v971
      %v1035 = vadd.f32 %v1034, %v972
      %v1036 = vadd.f32 %v1035, %v973
      %v1037 = vadd.f32 %v1036, %v974
      %v1038 = vadd.f32 %v1037, %v975
      %v1039 = vadd.f32 %v1038, %v976
      %v1040 = vadd.f32 %v1039, %v977
      %v1041 = vadd.f32 %v1040, %v978
      %v1042 = vadd.f32 %v1041, %v979
      %v1043 = vadd.f32 %v1042, %v980
      %v1044 = vadd.f32 %v1043, %v981
      %v1045 = vadd.f32 %v1044, %v982
      %v1046 = vadd.f32 %v1045, %v983
      %v1047 = vadd.f32 %v1046, %v984
      %v1048 = vadd.f32 %v1047, %v985
      %v1049 = vadd.f32 %v1048, %v986
      %v1050 = vadd.f32 %v1049, %v987
      %v1051 = vadd.f32 %v1050, %v988
      %v1052 = vadd.f32 %v1051, %v989
      %v1053 = vadd.f32 %v1052, %v990
      %v1054 = vadd.f32 %v1053, %v991
      %v1055 = vadd.f32 %v1054, %v992
      %v1056 = vadd.f32 %v1055, %v993
      %v1057 = vadd.f32 %v1056, %v994
      %v1058 = vadd.f32 %v1057, %v995
      %v1059 = vadd.f32 %v1058, %v996
      %v1060 = vadd.f32 %v1059, %v997
      %v1061 = vadd.f32 %v1060, %v998
      %v1062 = vadd.f32 %v1061, %v999
      %v1063 = vadd.f32 %v1062, %v1000
      %v1064 = vadd.f32 %v1063, %v1001
      %v1065 = vadd.f32 %v1064, %v1002
      %v1066 = vadd.f32 %v1065, %v1003
      %v1067 = vadd.f32 %v1066, %v1004
      %v1068 = vadd.f32 %v1067, %v1005
      %v1069 = vadd.f32 %v1068, %v1006
      %v1070 = vadd.f32 %v1069, %v1007
      %v1071 = vadd.f32 %v1070, %v1008
      %v1072 = vadd.f32 %v1071, %v1009
      %v1073 = vadd.f32 %v1072, %v1010
      %v1074 = vadd.f32 %v1073, %v1011
      %v1075 = vadd.f32 %v1074, %v1012
      %v1076 = vadd.f32 %v1075, %v1013
      %v1077 = vadd.f32 %v1076, %v1014
      %v1078 = vrot.slane %v1077, 4
      %v1079 = vadd.f32 %v1077, %v1078
      %v1080 = vrot.slane %v1079, 2
      %v1081 = vadd.f32 %v1079, %v1080
      %v1082 = vrot.slane %v1081, 1
      %v1083 = vadd.f32 %v1081, %v1082
      %vm1084 = vcmask 1040384
      %v1085 = vsel %vm1084, %v950, %v1083
      %1086 = vst [vmem:[%s184] sm:$0x3] %v1085
      %s1087 = smul.u32 64, %s15
      %p1088 = scmp.lt.s32.totalorder %s1087, 255
      %s1089 = scalar_select %p1088, %s1087, 255
      %s1090 = smul.addr %s1089, 8
      %s1091 = scalar_lea.vmem %s2, %s1090
      %p1092 = scmp.lt.s32.totalorder %s15, 3
      %s1093 = scalar_select %p1092, %s15, 3
      %s1094 = smul.addr %s1093, 2
      %s1095 = scalar_lea.vmem %s3, %s1094
      // Predicated region
      $region29: #{lenet_enc.4} parent=27 // pred_check
        %p1096 = pneg %p80
      $region30: #{lenet_enc.4} parent=27 // pred_check_branch
        %1098 = sbr.rel (%p1096) target = $region32
      $region31: #{lenet_enc.4} parent=27 // pred_region
        %s1099 = smul.u32 64, %s15
      $region32: #{lenet_enc.4} parent=27 // pred_fallthru
        _
      // Predicated region
      $region33: #{lenet_enc.4} parent=27 // pred_check
        %p1100 = pneg %p106
      $region34: #{lenet_enc.4} parent=27 // pred_check_branch
        %1102 = sbr.rel (%p1100) target = $region36
      $region35: #{lenet_enc.4} parent=27 // pred_region
        _
      $region36: #{lenet_enc.4} parent=27 // pred_fallthru
        _
    $region28: #{lenet_enc.4} parent=5 // pred_fallthru
      _
    %p1103 = scmp.le.s32.totalorder 2, %s10
    // Predicated region
    $region37: #{lenet_enc.4} parent=5 // pred_check
      %p1104 = pneg %p1103
    $region38: #{lenet_enc.4} parent=5 // pred_check_branch
      %1106 = sbr.rel (%p1104) target = $region40
    $region39: #{lenet_enc.4} parent=5 // pred_region
      %s1107 = ssub.s32 %s10, 2
      // Predicated region
      $region41: #{lenet_enc.4} parent=39 // pred_check
        %p1108 = pneg %p86
      $region42: #{lenet_enc.4} parent=39 // pred_check_branch
        %1110 = sbr.rel (%p1108) target = $region44
      $region43: #{lenet_enc.4} parent=39 // pred_region
        %s1111 = smul.u32 64, %s16
        %p1112 = scmp.lt.s32.totalorder %s1111, 255
        %s1113 = scalar_select %p1112, %s1111, 255
        %s1114 = smul.addr %s1113, 8
        %s1115 = scalar_lea.vmem %s2, %s1114
      $region44: #{lenet_enc.4} parent=39 // pred_fallthru
        _
      // Predicated region
      $region45: #{lenet_enc.4} parent=39 // pred_check
        %p1116 = pneg %p112
      $region46: #{lenet_enc.4} parent=39 // pred_check_branch
        %1118 = sbr.rel (%p1116) target = $region48
      $region47: #{lenet_enc.4} parent=39 // pred_region
        %p1119 = scmp.lt.s32.totalorder %s16, 3
        %s1120 = scalar_select %p1119, %s16, 3
        %s1121 = smul.addr %s1120, 2
        %s1122 = scalar_lea.vmem %s3, %s1121
      $region48: #{lenet_enc.4} parent=39 // pred_fallthru
        _
    $region40: #{lenet_enc.4} parent=5 // pred_fallthru
      _
  $region6: #{lenet_enc.4} parent=0 // loop_footer
    %s14 = sadd.s32 1, %s10
  $region7: #{lenet_enc.4} parent=0 // loop_footer_branch
    %9 = sbr.rel target = $region3
  $region8: #{lenet_enc.4} parent=0 // loop_exit
    _

// kernel: lenet_enc.5
$region0: #{lenet_enc.5}
  #allocation0 [shape = 'u32[]', space=smem, size = 0x4, offset = 0x4, fixed_abs, tag = 'smem constant byte address 0x4 - core index']
  #allocation1 [shape = 'u32[144,128]{1,0:T(1,128)}', space=vmem, size = 0x12000, scoped, tag = 'internal scratch']
  %s0 = inlined_call_operand.vmem [shape: f32[2,30,15,256], index: 0, kind: input, shape index: {}]
  %s1 = inlined_call_operand.vmem [shape: f32[1,256], index: 1, kind: input, shape index: {}]
  %s2 = inlined_call_operand.vmem [shape: f32[1,256], index: 2, kind: input, shape index: {}]
  %s3 = inlined_call_operand.vmem [shape: f32[2,15,15,128], index: 3, kind: output, shape index: {}]
  %s4 = sld [smem:[#allocation0]]
  $region45: #{lenet_enc.5} parent=0
    _
  %s6 = ssub.s32 1, %s4
  %s7 = scalar_select 0, %s6, %s4
  loop: start=0, step=1, limit=4
  $region2: #{lenet_enc.5} parent=0 // loop_pre_header
    _
  $region3: #{lenet_enc.5} parent=0 // loop_header
    %s9 = sphi 0, %s13
    %p10 = scmp.ge.s32.totalorder %s9, 4
    %s19 = sphi 0, %s21
    %s22 = sphi 0, %s19
    %s23 = sphi 0, %s22
    %s39 = sphi 0, %s23
    %s43 = sphi 0, %s43
    %s45 = sphi 0, %s43
    %s46 = sphi 0, %s45
    %s60 = sphi 0, %s46
    %s64 = sphi 0, %s64
    %s66 = sphi 0, %s64
    %s67 = sphi 0, %s66
    %s81 = sphi 0, %s67
    %s87 = sphi 0, %s89
    %s90 = sphi 0, %s87
    %s91 = sphi 0, %s90
    %s107 = sphi 0, %s91
  $region4: #{lenet_enc.5} parent=0 // loop_header_branch
    %12 = sbr.rel (%p10) target = $region8
  $region5: #{lenet_enc.5} parent=0 // loop_body
    %s14 = ssub.s32 %s9, 1
    %s15 = ssub.s32 %s9, 2
    %s16 = sadd.s32 %s9, 1
    %s17 = ssub.s32 %s9, %s16
    %p18 = scmp.eq.s32.totalorder %s17, 0
    %s20 = sadd.s32 %s19, 1
    %s21 = scalar_select %p18, %s19, %s20
    %p24 = pneg %p18
    %p25 = scmp.eq.s32.totalorder %s9, 1
    %p26 = por %p24, %p25
    %p27 = scmp.ne.s32.totalorder %s19, %s22
    %p28 = scmp.eq.s32.totalorder %s9, 0
    %p29 = por %p27, %p28
    %p30 = scmp.ne.s32.totalorder %s19, %s22
    %p31 = scmp.eq.s32.totalorder %s14, 1
    %p32 = por %p30, %p31
    %p33 = scmp.ne.s32.totalorder %s22, %s23
    %p34 = scmp.eq.s32.totalorder %s14, 0
    %p35 = por %p33, %p34
    %p36 = scmp.ne.s32.totalorder %s22, %s23
    %p37 = scmp.eq.s32.totalorder %s15, 1
    %p38 = por %p36, %p37
    %p40 = scmp.ne.s32.totalorder %s23, %s39
    %p41 = scmp.eq.s32.totalorder %s15, 0
    %p42 = por %p40, %p41
    %s44 = sadd.s32 %s43, 1
    %p47 = scmp.eq.s32.totalorder %s9, 1
    %p48 = scmp.ne.s32.totalorder %s43, %s45
    %p49 = scmp.eq.s32.totalorder %s9, 0
    %p50 = por %p48, %p49
    %p51 = scmp.ne.s32.totalorder %s43, %s45
    %p52 = scmp.eq.s32.totalorder %s14, 1
    %p53 = por %p51, %p52
    %p54 = scmp.ne.s32.totalorder %s45, %s46
    %p55 = scmp.eq.s32.totalorder %s14, 0
    %p56 = por %p54, %p55
    %p57 = scmp.ne.s32.totalorder %s45, %s46
    %p58 = scmp.eq.s32.totalorder %s15, 1
    %p59 = por %p57, %p58
    %p61 = scmp.ne.s32.totalorder %s46, %s60
    %p62 = scmp.eq.s32.totalorder %s15, 0
    %p63 = por %p61, %p62
    %s65 = sadd.s32 %s64, 1
    %p68 = scmp.eq.s32.totalorder %s9, 1
    %p69 = scmp.ne.s32.totalorder %s64, %s66
    %p70 = scmp.eq.s32.totalorder %s9, 0
    %p71 = por %p69, %p70
    %p72 = scmp.ne.s32.totalorder %s64, %s66
    %p73 = scmp.eq.s32.totalorder %s14, 1
    %p74 = por %p72, %p73
    %p75 = scmp.ne.s32.totalorder %s66, %s67
    %p76 = scmp.eq.s32.totalorder %s14, 0
    %p77 = por %p75, %p76
    %p78 = scmp.ne.s32.totalorder %s66, %s67
    %p79 = scmp.eq.s32.totalorder %s15, 1
    %p80 = por %p78, %p79
    %p82 = scmp.ne.s32.totalorder %s67, %s81
    %p83 = scmp.eq.s32.totalorder %s15, 0
    %p84 = por %p82, %p83
    %s85 = ssub.s32 %s9, %s16
    %p86 = scmp.eq.s32.totalorder %s85, 0
    %s88 = sadd.s32 %s87, 1
    %s89 = scalar_select %p86, %s87, %s88
    %p92 = pneg %p86
    %p93 = scmp.eq.s32.totalorder %s9, 1
    %p94 = por %p92, %p93
    %p95 = scmp.ne.s32.totalorder %s87, %s90
    %p96 = scmp.eq.s32.totalorder %s9, 0
    %p97 = por %p95, %p96
    %p98 = scmp.ne.s32.totalorder %s87, %s90
    %p99 = scmp.eq.s32.totalorder %s14, 1
    %p100 = por %p98, %p99
    %p101 = scmp.ne.s32.totalorder %s90, %s91
    %p102 = scmp.eq.s32.totalorder %s14, 0
    %p103 = por %p101, %p102
    %p104 = scmp.ne.s32.totalorder %s90, %s91
    %p105 = scmp.eq.s32.totalorder %s15, 1
    %p106 = por %p104, %p105
    %p108 = scmp.ne.s32.totalorder %s91, %s107
    %p109 = scmp.eq.s32.totalorder %s15, 0
    %p110 = por %p108, %p109
    %p111 = scmp.le.s32.totalorder 1, %s9
    %p112 = scmp.lt.s32.totalorder %s9, 3
    %p113 = pnand %p111, %p112
    %p114 = pneg %p113
    // Predicated region
    $region9: #{lenet_enc.5} parent=5 // pred_check
      _
    $region10: #{lenet_enc.5} parent=5 // pred_check_branch
      %116 = sbr.rel (%p113) target = $region12
    $region11: #{lenet_enc.5} parent=5 // pred_region
      %s117 = ssub.s32 %s9, 1
      // Predicated region
      $region13: #{lenet_enc.5} parent=11 // pred_check
        %p118 = pneg %p56
      $region14: #{lenet_enc.5} parent=11 // pred_check_branch
        %120 = sbr.rel (%p118) target = $region16
      $region15: #{lenet_enc.5} parent=11 // pred_region
        _
      $region16: #{lenet_enc.5} parent=11 // pred_fallthru
        _
      // Predicated region
      $region17: #{lenet_enc.5} parent=11 // pred_check
        %p121 = pneg %p77
      $region18: #{lenet_enc.5} parent=11 // pred_check_branch
        %123 = sbr.rel (%p121) target = $region20
      $region19: #{lenet_enc.5} parent=11 // pred_region
        _
      $region20: #{lenet_enc.5} parent=11 // pred_fallthru
        _
    $region12: #{lenet_enc.5} parent=5 // pred_fallthru
      _
    %p124 = scmp.lt.s32.totalorder %s9, 2
    // Predicated region
    $region21: #{lenet_enc.5} parent=5 // pred_check
      %p125 = pneg %p124
    $region22: #{lenet_enc.5} parent=5 // pred_check_branch
      %127 = sbr.rel (%p125) target = $region24
    $region23: #{lenet_enc.5} parent=5 // pred_region
      // Predicated region
      $region25: #{lenet_enc.5} parent=23 // pred_check
        %p128 = pneg %p29
      $region26: #{lenet_enc.5} parent=23 // pred_check_branch
        %130 = sbr.rel (%p128) target = $region28
      $region27: #{lenet_enc.5} parent=23 // pred_region
        %p131 = scmp.lt.s32.totalorder %s9, 1
        %s132 = scalar_select %p131, %s9, 1
        %s133 = smul.addr %s132, 120
        %s134 = smul.addr %s133, 8
        %s135 = scalar_lea.vmem %s0, %s134
      $region28: #{lenet_enc.5} parent=23 // pred_fallthru
        _
    $region24: #{lenet_enc.5} parent=5 // pred_fallthru
      _
    %p136 = scmp.le.s32.totalorder 1, %s9
    %p137 = scmp.lt.s32.totalorder %s9, 3
    %p138 = pnand %p136, %p137
    %p139 = pneg %p138
    // Predicated region
    $region29: #{lenet_enc.5} parent=5 // pred_check
      _
    $region30: #{lenet_enc.5} parent=5 // pred_check_branch
      %141 = sbr.rel (%p138) target = $region32
    $region31: #{lenet_enc.5} parent=5 // pred_region
      %s142 = ssub.s32 %s9, 1
      %p143 = scmp.lt.s32.totalorder %s14, 1
      %s144 = scalar_select %p143, %s14, 1
      %s145 = smul.addr %s144, 120
      %s146 = smul.addr %s145, 8
      %s147 = scalar_lea.vmem %s0, %s146
      %p148 = pneg %p35
      %p149 = pneg %p32
      %p150 = pneg %p56
      %p151 = pneg %p53
      %p152 = pneg %p77
      %p153 = pneg %p74
      %p154 = pneg %p103
      %p155 = pneg %p100
      %p156 = scmp.lt.s32.totalorder %s14, 1
      %s157 = scalar_select %p156, %s14, 1
      %s158 = smul.addr %s157, 30
      %s159 = smul.addr %s158, 8
      %s160 = scalar_lea.vmem %s3, %s159
      %p161 = scmp.lt.s32.totalorder %s14, 1
      %s162 = scalar_select %p161, %s14, 1
      %s163 = smul.addr %s162, 120
      %s164 = smul.addr %s163, 8
      %s165 = scalar_lea.vmem %s0, %s164
      %p166 = scmp.lt.s32.totalorder %s14, 1
      %s167 = scalar_select %p166, %s14, 1
      %s168 = smul.addr %s167, 30
      %s169 = smul.addr %s168, 8
      %s170 = scalar_lea.vmem %s3, %s169
      %v171 = vld [vmem:[%s1] sm:$0x3]
      %v172 = vld [vmem:[%s2] sm:$0x3]
      %v173 = vld [vmem:[%s165] sm:$0xff]
      %v174 = vld [vmem:[%s165 + $0x8] sm:$0xff]
      %v175 = vld [vmem:[%s165 + $0x10] sm:$0x7f]
      %v176 = vld [vmem:[%s165 + $0x18] sm:$0x7f]
      %v177 = vld [vmem:[%s165 + $0x20] sm:$0xff]
      %v178 = vld [vmem:[%s165 + $0x28] sm:$0xff]
      %v179 = vld [vmem:[%s165 + $0x30] sm:$0x7f]
      %v180 = vld [vmem:[%s165 + $0x38] sm:$0x7f]
      %v181 = vld [vmem:[%s165 + $0x40] sm:$0xff]
      %v182 = vld [vmem:[%s165 + $0x48] sm:$0xff]
      %v183 = vld [vmem:[%s165 + $0x50] sm:$0x7f]
      %v184 = vld [vmem:[%s165 + $0x58] sm:$0x7f]
      %v185 = vld [vmem:[%s165 + $0x60] sm:$0xff]
      %v186 = vld [vmem:[%s165 + $0x68] sm:$0xff]
      %v187 = vld [vmem:[%s165 + $0x70] sm:$0x7f]
      %v188 = vld [vmem:[%s165 + $0x78] sm:$0x7f]
      %v189 = vld [vmem:[%s165 + $0x80] sm:$0xff]
      %v190 = vld [vmem:[%s165 + $0x88] sm:$0xff]
      %v191 = vld [vmem:[%s165 + $0x90] sm:$0x7f]
      %v192 = vld [vmem:[%s165 + $0x98] sm:$0x7f]
      %v193 = vld [vmem:[%s165 + $0xa0] sm:$0xff]
      %v194 = vld [vmem:[%s165 + $0xa8] sm:$0xff]
      %v195 = vld [vmem:[%s165 + $0xb0] sm:$0x7f]
      %v196 = vld [vmem:[%s165 + $0xb8] sm:$0x7f]
      %v197 = vld [vmem:[%s165 + $0xc0] sm:$0xff]
      %v198 = vld [vmem:[%s165 + $0xc8] sm:$0xff]
      %v199 = vld [vmem:[%s165 + $0xd0] sm:$0x7f]
      %v200 = vld [vmem:[%s165 + $0xd8] sm:$0x7f]
      %v201 = vld [vmem:[%s165 + $0xe0] sm:$0xff]
      %v202 = vld [vmem:[%s165 + $0xe8] sm:$0xff]
      %v203 = vld [vmem:[%s165 + $0xf0] sm:$0x7f]
      %v204 = vld [vmem:[%s165 + $0xf8] sm:$0x7f]
      %v205 = vld [vmem:[%s165 + $0x100] sm:$0xff]
      %v206 = vld [vmem:[%s165 + $0x108] sm:$0xff]
      %v207 = vld [vmem:[%s165 + $0x110] sm:$0x7f]
      %v208 = vld [vmem:[%s165 + $0x118] sm:$0x7f]
      %v209 = vld [vmem:[%s165 + $0x120] sm:$0xff]
      %v210 = vld [vmem:[%s165 + $0x128] sm:$0xff]
      %v211 = vld [vmem:[%s165 + $0x130] sm:$0x7f]
      %v212 = vld [vmem:[%s165 + $0x138] sm:$0x7f]
      %v213 = vld [vmem:[%s165 + $0x140] sm:$0xff]
      %v214 = vld [vmem:[%s165 + $0x148] sm:$0xff]
      %v215 = vld [vmem:[%s165 + $0x150] sm:$0x7f]
      %v216 = vld [vmem:[%s165 + $0x158] sm:$0x7f]
      %v217 = vld [vmem:[%s165 + $0x160] sm:$0xff]
      %v218 = vld [vmem:[%s165 + $0x168] sm:$0xff]
      %v219 = vld [vmem:[%s165 + $0x170] sm:$0x7f]
      %v220 = vld [vmem:[%s165 + $0x178] sm:$0x7f]
      %v221 = vld [vmem:[%s165 + $0x180] sm:$0xff]
      %v222 = vld [vmem:[%s165 + $0x188] sm:$0xff]
      %v223 = vld [vmem:[%s165 + $0x190] sm:$0x7f]
      %v224 = vld [vmem:[%s165 + $0x198] sm:$0x7f]
      %v225 = vld [vmem:[%s165 + $0x1a0] sm:$0xff]
      %v226 = vld [vmem:[%s165 + $0x1a8] sm:$0xff]
      %v227 = vld [vmem:[%s165 + $0x1b0] sm:$0x7f]
      %v228 = vld [vmem:[%s165 + $0x1b8] sm:$0x7f]
      %v229 = vld [vmem:[%s165 + $0x1c0] sm:$0xff]
      %v230 = vld [vmem:[%s165 + $0x1c8] sm:$0xff]
      %v231 = vld [vmem:[%s165 + $0x1d0] sm:$0x7f]
      %v232 = vld [vmem:[%s165 + $0x1d8] sm:$0x7f]
      %v233 = vld [vmem:[%s165 + $0x1e0] sm:$0xff]
      %v234 = vld [vmem:[%s165 + $0x1e8] sm:$0xff]
      %v235 = vld [vmem:[%s165 + $0x1f0] sm:$0x7f]
      %v236 = vld [vmem:[%s165 + $0x1f8] sm:$0x7f]
      %v237 = vld [vmem:[%s165 + $0x200] sm:$0xff]
      %v238 = vld [vmem:[%s165 + $0x208] sm:$0xff]
      %v239 = vld [vmem:[%s165 + $0x210] sm:$0x7f]
      %v240 = vld [vmem:[%s165 + $0x218] sm:$0x7f]
      %v241 = vld [vmem:[%s165 + $0x220] sm:$0xff]
      %v242 = vld [vmem:[%s165 + $0x228] sm:$0xff]
      %v243 = vld [vmem:[%s165 + $0x230] sm:$0x7f]
      %v244 = vld [vmem:[%s165 + $0x238] sm:$0x7f]
      %v245 = vld [vmem:[%s165 + $0x240] sm:$0xff]
      %v246 = vld [vmem:[%s165 + $0x248] sm:$0xff]
      %v247 = vld [vmem:[%s165 + $0x250] sm:$0x7f]
      %v248 = vld [vmem:[%s165 + $0x258] sm:$0x7f]
      %v249 = vld [vmem:[%s165 + $0x260] sm:$0xff]
      %v250 = vld [vmem:[%s165 + $0x268] sm:$0xff]
      %v251 = vld [vmem:[%s165 + $0x270] sm:$0x7f]
      %v252 = vld [vmem:[%s165 + $0x278] sm:$0x7f]
      %v253 = vld [vmem:[%s165 + $0x280] sm:$0xff]
      %v254 = vld [vmem:[%s165 + $0x288] sm:$0xff]
      %v255 = vld [vmem:[%s165 + $0x290] sm:$0x7f]
      %v256 = vld [vmem:[%s165 + $0x298] sm:$0x7f]
      %v257 = vld [vmem:[%s165 + $0x2a0] sm:$0xff]
      %v258 = vld [vmem:[%s165 + $0x2a8] sm:$0xff]
      %v259 = vld [vmem:[%s165 + $0x2b0] sm:$0x7f]
      %v260 = vld [vmem:[%s165 + $0x2b8] sm:$0x7f]
      %v261 = vld [vmem:[%s165 + $0x2c0] sm:$0xff]
      %v262 = vld [vmem:[%s165 + $0x2c8] sm:$0xff]
      %v263 = vld [vmem:[%s165 + $0x2d0] sm:$0x7f]
      %v264 = vld [vmem:[%s165 + $0x2d8] sm:$0x7f]
      %v265 = vld [vmem:[%s165 + $0x2e0] sm:$0xff]
      %v266 = vld [vmem:[%s165 + $0x2e8] sm:$0xff]
      %v267 = vld [vmem:[%s165 + $0x2f0] sm:$0x7f]
      %v268 = vld [vmem:[%s165 + $0x2f8] sm:$0x7f]
      %v269 = vld [vmem:[%s165 + $0x300] sm:$0xff]
      %v270 = vld [vmem:[%s165 + $0x308] sm:$0xff]
      %v271 = vld [vmem:[%s165 + $0x310] sm:$0x7f]
      %v272 = vld [vmem:[%s165 + $0x318] sm:$0x7f]
      %v273 = vld [vmem:[%s165 + $0x320] sm:$0xff]
      %v274 = vld [vmem:[%s165 + $0x328] sm:$0xff]
      %v275 = vld [vmem:[%s165 + $0x330] sm:$0x7f]
      %v276 = vld [vmem:[%s165 + $0x338] sm:$0x7f]
      %v277 = vld [vmem:[%s165 + $0x340] sm:$0xff]
      %v278 = vld [vmem:[%s165 + $0x348] sm:$0xff]
      %v279 = vld [vmem:[%s165 + $0x350] sm:$0x7f]
      %v280 = vld [vmem:[%s165 + $0x358] sm:$0x7f]
      %v281 = vld [vmem:[%s165 + $0x360] sm:$0xff]
      %v282 = vld [vmem:[%s165 + $0x368] sm:$0xff]
      %v283 = vld [vmem:[%s165 + $0x370] sm:$0x7f]
      %v284 = vld [vmem:[%s165 + $0x378] sm:$0x7f]
      %v285 = vld [vmem:[%s165 + $0x380] sm:$0xff]
      %v286 = vld [vmem:[%s165 + $0x388] sm:$0xff]
      %v287 = vld [vmem:[%s165 + $0x390] sm:$0x7f]
      %v288 = vld [vmem:[%s165 + $0x398] sm:$0x7f]
      %v289 = vld [vmem:[%s165 + $0x3a0] sm:$0xff]
      %v290 = vld [vmem:[%s165 + $0x3a8] sm:$0xff]
      %v291 = vld [vmem:[%s165 + $0x3b0] sm:$0x7f]
      %v292 = vld [vmem:[%s165 + $0x3b8] sm:$0x7f]
      %v294 = vlaneseq
      %v295 = vshrl.u32 %v294, 7
      %v296 = vsub.s32 0, %v295
      %v297 = vrot.slane %v171, %v296
      %v298 = vlaneseq
      %v299 = vshrl.u32 %v298, 7
      %v300 = vsub.s32 1, %v299
      %v301 = vrot.slane %v171, %v300
      %v304 = vmul.f32 %v173, %v297
      %v305 = vmul.f32 %v174, %v301
      %v306 = vmul.f32 %v175, %v297
      %v307 = vmul.f32 %v176, %v301
      %v308 = vmul.f32 %v177, %v297
      %v309 = vmul.f32 %v178, %v301
      %v310 = vmul.f32 %v179, %v297
      %v311 = vmul.f32 %v180, %v301
      %v312 = vmul.f32 %v181, %v297
      %v313 = vmul.f32 %v182, %v301
      %v314 = vmul.f32 %v183, %v297
      %v315 = vmul.f32 %v184, %v301
      %v316 = vmul.f32 %v185, %v297
      %v317 = vmul.f32 %v186, %v301
      %v318 = vmul.f32 %v187, %v297
      %v319 = vmul.f32 %v188, %v301
      %v320 = vmul.f32 %v189, %v297
      %v321 = vmul.f32 %v190, %v301
      %v322 = vmul.f32 %v191, %v297
      %v323 = vmul.f32 %v192, %v301
      %v324 = vmul.f32 %v193, %v297
      %v325 = vmul.f32 %v194, %v301
      %v326 = vmul.f32 %v195, %v297
      %v327 = vmul.f32 %v196, %v301
      %v328 = vmul.f32 %v197, %v297
      %v329 = vmul.f32 %v198, %v301
      %v330 = vmul.f32 %v199, %v297
      %v331 = vmul.f32 %v200, %v301
      %v332 = vmul.f32 %v201, %v297
      %v333 = vmul.f32 %v202, %v301
      %v334 = vmul.f32 %v203, %v297
      %v335 = vmul.f32 %v204, %v301
      %v336 = vmul.f32 %v205, %v297
      %v337 = vmul.f32 %v206, %v301
      %v338 = vmul.f32 %v207, %v297
      %v339 = vmul.f32 %v208, %v301
      %v340 = vmul.f32 %v209, %v297
      %v341 = vmul.f32 %v210, %v301
      %v342 = vmul.f32 %v211, %v297
      %v343 = vmul.f32 %v212, %v301
      %v344 = vmul.f32 %v213, %v297
      %v345 = vmul.f32 %v214, %v301
      %v346 = vmul.f32 %v215, %v297
      %v347 = vmul.f32 %v216, %v301
      %v348 = vmul.f32 %v217, %v297
      %v349 = vmul.f32 %v218, %v301
      %v350 = vmul.f32 %v219, %v297
      %v351 = vmul.f32 %v220, %v301
      %v352 = vmul.f32 %v221, %v297
      %v353 = vmul.f32 %v222, %v301
      %v354 = vmul.f32 %v223, %v297
      %v355 = vmul.f32 %v224, %v301
      %v356 = vmul.f32 %v225, %v297
      %v357 = vmul.f32 %v226, %v301
      %v358 = vmul.f32 %v227, %v297
      %v359 = vmul.f32 %v228, %v301
      %v360 = vmul.f32 %v229, %v297
      %v361 = vmul.f32 %v230, %v301
      %v362 = vmul.f32 %v231, %v297
      %v363 = vmul.f32 %v232, %v301
      %v364 = vmul.f32 %v233, %v297
      %v365 = vmul.f32 %v234, %v301
      %v366 = vmul.f32 %v235, %v297
      %v367 = vmul.f32 %v236, %v301
      %v368 = vmul.f32 %v237, %v297
      %v369 = vmul.f32 %v238, %v301
      %v370 = vmul.f32 %v239, %v297
      %v371 = vmul.f32 %v240, %v301
      %v372 = vmul.f32 %v241, %v297
      %v373 = vmul.f32 %v242, %v301
      %v374 = vmul.f32 %v243, %v297
      %v375 = vmul.f32 %v244, %v301
      %v376 = vmul.f32 %v245, %v297
      %v377 = vmul.f32 %v246, %v301
      %v378 = vmul.f32 %v247, %v297
      %v379 = vmul.f32 %v248, %v301
      %v380 = vmul.f32 %v249, %v297
      %v381 = vmul.f32 %v250, %v301
      %v382 = vmul.f32 %v251, %v297
      %v383 = vmul.f32 %v252, %v301
      %v384 = vmul.f32 %v253, %v297
      %v385 = vmul.f32 %v254, %v301
      %v386 = vmul.f32 %v255, %v297
      %v387 = vmul.f32 %v256, %v301
      %v388 = vmul.f32 %v257, %v297
      %v389 = vmul.f32 %v258, %v301
      %v390 = vmul.f32 %v259, %v297
      %v391 = vmul.f32 %v260, %v301
      %v392 = vmul.f32 %v261, %v297
      %v393 = vmul.f32 %v262, %v301
      %v394 = vmul.f32 %v263, %v297
      %v395 = vmul.f32 %v264, %v301
      %v396 = vmul.f32 %v265, %v297
      %v397 = vmul.f32 %v266, %v301
      %v398 = vmul.f32 %v267, %v297
      %v399 = vmul.f32 %v268, %v301
      %v400 = vmul.f32 %v269, %v297
      %v401 = vmul.f32 %v270, %v301
      %v402 = vmul.f32 %v271, %v297
      %v403 = vmul.f32 %v272, %v301
      %v404 = vmul.f32 %v273, %v297
      %v405 = vmul.f32 %v274, %v301
      %v406 = vmul.f32 %v275, %v297
      %v407 = vmul.f32 %v276, %v301
      %v408 = vmul.f32 %v277, %v297
      %v409 = vmul.f32 %v278, %v301
      %v410 = vmul.f32 %v279, %v297
      %v411 = vmul.f32 %v280, %v301
      %v412 = vmul.f32 %v281, %v297
      %v413 = vmul.f32 %v282, %v301
      %v414 = vmul.f32 %v283, %v297
      %v415 = vmul.f32 %v284, %v301
      %v416 = vmul.f32 %v285, %v297
      %v417 = vmul.f32 %v286, %v301
      %v418 = vmul.f32 %v287, %v297
      %v419 = vmul.f32 %v288, %v301
      %v420 = vmul.f32 %v289, %v297
      %v421 = vmul.f32 %v290, %v301
      %v422 = vmul.f32 %v291, %v297
      %v423 = vmul.f32 %v292, %v301
      %v425 = vlaneseq
      %v426 = vshrl.u32 %v425, 7
      %v427 = vsub.s32 0, %v426
      %v428 = vrot.slane %v172, %v427
      %v429 = vlaneseq
      %v430 = vshrl.u32 %v429, 7
      %v431 = vsub.s32 1, %v430
      %v432 = vrot.slane %v172, %v431
      %v435 = vadd.f32 %v304, %v428
      %v436 = vadd.f32 %v305, %v432
      %v437 = vadd.f32 %v306, %v428
      %v438 = vadd.f32 %v307, %v432
      %v439 = vadd.f32 %v308, %v428
      %v440 = vadd.f32 %v309, %v432
      %v441 = vadd.f32 %v310, %v428
      %v442 = vadd.f32 %v311, %v432
      %v443 = vadd.f32 %v312, %v428
      %v444 = vadd.f32 %v313, %v432
      %v445 = vadd.f32 %v314, %v428
      %v446 = vadd.f32 %v315, %v432
      %v447 = vadd.f32 %v316, %v428
      %v448 = vadd.f32 %v317, %v432
      %v449 = vadd.f32 %v318, %v428
      %v450 = vadd.f32 %v319, %v432
      %v451 = vadd.f32 %v320, %v428
      %v452 = vadd.f32 %v321, %v432
      %v453 = vadd.f32 %v322, %v428
      %v454 = vadd.f32 %v323, %v432
      %v455 = vadd.f32 %v324, %v428
      %v456 = vadd.f32 %v325, %v432
      %v457 = vadd.f32 %v326, %v428
      %v458 = vadd.f32 %v327, %v432
      %v459 = vadd.f32 %v328, %v428
      %v460 = vadd.f32 %v329, %v432
      %v461 = vadd.f32 %v330, %v428
      %v462 = vadd.f32 %v331, %v432
      %v463 = vadd.f32 %v332, %v428
      %v464 = vadd.f32 %v333, %v432
      %v465 = vadd.f32 %v334, %v428
      %v466 = vadd.f32 %v335, %v432
      %v467 = vadd.f32 %v336, %v428
      %v468 = vadd.f32 %v337, %v432
      %v469 = vadd.f32 %v338, %v428
      %v470 = vadd.f32 %v339, %v432
      %v471 = vadd.f32 %v340, %v428
      %v472 = vadd.f32 %v341, %v432
      %v473 = vadd.f32 %v342, %v428
      %v474 = vadd.f32 %v343, %v432
      %v475 = vadd.f32 %v344, %v428
      %v476 = vadd.f32 %v345, %v432
      %v477 = vadd.f32 %v346, %v428
      %v478 = vadd.f32 %v347, %v432
      %v479 = vadd.f32 %v348, %v428
      %v480 = vadd.f32 %v349, %v432
      %v481 = vadd.f32 %v350, %v428
      %v482 = vadd.f32 %v351, %v432
      %v483 = vadd.f32 %v352, %v428
      %v484 = vadd.f32 %v353, %v432
      %v485 = vadd.f32 %v354, %v428
      %v486 = vadd.f32 %v355, %v432
      %v487 = vadd.f32 %v356, %v428
      %v488 = vadd.f32 %v357, %v432
      %v489 = vadd.f32 %v358, %v428
      %v490 = vadd.f32 %v359, %v432
      %v491 = vadd.f32 %v360, %v428
      %v492 = vadd.f32 %v361, %v432
      %v493 = vadd.f32 %v362, %v428
      %v494 = vadd.f32 %v363, %v432
      %v495 = vadd.f32 %v364, %v428
      %v496 = vadd.f32 %v365, %v432
      %v497 = vadd.f32 %v366, %v428
      %v498 = vadd.f32 %v367, %v432
      %v499 = vadd.f32 %v368, %v428
      %v500 = vadd.f32 %v369, %v432
      %v501 = vadd.f32 %v370, %v428
      %v502 = vadd.f32 %v371, %v432
      %v503 = vadd.f32 %v372, %v428
      %v504 = vadd.f32 %v373, %v432
      %v505 = vadd.f32 %v374, %v428
      %v506 = vadd.f32 %v375, %v432
      %v507 = vadd.f32 %v376, %v428
      %v508 = vadd.f32 %v377, %v432
      %v509 = vadd.f32 %v378, %v428
      %v510 = vadd.f32 %v379, %v432
      %v511 = vadd.f32 %v380, %v428
      %v512 = vadd.f32 %v381, %v432
      %v513 = vadd.f32 %v382, %v428
      %v514 = vadd.f32 %v383, %v432
      %v515 = vadd.f32 %v384, %v428
      %v516 = vadd.f32 %v385, %v432
      %v517 = vadd.f32 %v386, %v428
      %v518 = vadd.f32 %v387, %v432
      %v519 = vadd.f32 %v388, %v428
      %v520 = vadd.f32 %v389, %v432
      %v521 = vadd.f32 %v390, %v428
      %v522 = vadd.f32 %v391, %v432
      %v523 = vadd.f32 %v392, %v428
      %v524 = vadd.f32 %v393, %v432
      %v525 = vadd.f32 %v394, %v428
      %v526 = vadd.f32 %v395, %v432
      %v527 = vadd.f32 %v396, %v428
      %v528 = vadd.f32 %v397, %v432
      %v529 = vadd.f32 %v398, %v428
      %v530 = vadd.f32 %v399, %v432
      %v531 = vadd.f32 %v400, %v428
      %v532 = vadd.f32 %v401, %v432
      %v533 = vadd.f32 %v402, %v428
      %v534 = vadd.f32 %v403, %v432
      %v535 = vadd.f32 %v404, %v428
      %v536 = vadd.f32 %v405, %v432
      %v537 = vadd.f32 %v406, %v428
      %v538 = vadd.f32 %v407, %v432
      %v539 = vadd.f32 %v408, %v428
      %v540 = vadd.f32 %v409, %v432
      %v541 = vadd.f32 %v410, %v428
      %v542 = vadd.f32 %v411, %v432
      %v543 = vadd.f32 %v412, %v428
      %v544 = vadd.f32 %v413, %v432
      %v545 = vadd.f32 %v414, %v428
      %v546 = vadd.f32 %v415, %v432
      %v547 = vadd.f32 %v416, %v428
      %v548 = vadd.f32 %v417, %v432
      %v549 = vadd.f32 %v418, %v428
      %v550 = vadd.f32 %v419, %v432
      %v551 = vadd.f32 %v420, %v428
      %v552 = vadd.f32 %v421, %v432
      %v553 = vadd.f32 %v422, %v428
      %v554 = vadd.f32 %v423, %v432
      %v555 = vmax.f32 %v435, 0.0
      %v556 = vmax.f32 %v436, 0.0
      %v557 = vmax.f32 %v437, 0.0
      %v558 = vmax.f32 %v438, 0.0
      %v559 = vmax.f32 %v439, 0.0
      %v560 = vmax.f32 %v440, 0.0
      %v561 = vmax.f32 %v441, 0.0
      %v562 = vmax.f32 %v442, 0.0
      %v563 = vmax.f32 %v443, 0.0
      %v564 = vmax.f32 %v444, 0.0
      %v565 = vmax.f32 %v445, 0.0
      %v566 = vmax.f32 %v446, 0.0
      %v567 = vmax.f32 %v447, 0.0
      %v568 = vmax.f32 %v448, 0.0
      %v569 = vmax.f32 %v449, 0.0
      %v570 = vmax.f32 %v450, 0.0
      %v571 = vmax.f32 %v451, 0.0
      %v572 = vmax.f32 %v452, 0.0
      %v573 = vmax.f32 %v453, 0.0
      %v574 = vmax.f32 %v454, 0.0
      %v575 = vmax.f32 %v455, 0.0
      %v576 = vmax.f32 %v456, 0.0
      %v577 = vmax.f32 %v457, 0.0
      %v578 = vmax.f32 %v458, 0.0
      %v579 = vmax.f32 %v459, 0.0
      %v580 = vmax.f32 %v460, 0.0
      %v581 = vmax.f32 %v461, 0.0
      %v582 = vmax.f32 %v462, 0.0
      %v583 = vmax.f32 %v463, 0.0
      %v584 = vmax.f32 %v464, 0.0
      %v585 = vmax.f32 %v465, 0.0
      %v586 = vmax.f32 %v466, 0.0
      %v587 = vmax.f32 %v467, 0.0
      %v588 = vmax.f32 %v468, 0.0
      %v589 = vmax.f32 %v469, 0.0
      %v590 = vmax.f32 %v470, 0.0
      %v591 = vmax.f32 %v471, 0.0
      %v592 = vmax.f32 %v472, 0.0
      %v593 = vmax.f32 %v473, 0.0
      %v594 = vmax.f32 %v474, 0.0
      %v595 = vmax.f32 %v475, 0.0
      %v596 = vmax.f32 %v476, 0.0
      %v597 = vmax.f32 %v477, 0.0
      %v598 = vmax.f32 %v478, 0.0
      %v599 = vmax.f32 %v479, 0.0
      %v600 = vmax.f32 %v480, 0.0
      %v601 = vmax.f32 %v481, 0.0
      %v602 = vmax.f32 %v482, 0.0
      %v603 = vmax.f32 %v483, 0.0
      %v604 = vmax.f32 %v484, 0.0
      %v605 = vmax.f32 %v485, 0.0
      %v606 = vmax.f32 %v486, 0.0
      %v607 = vmax.f32 %v487, 0.0
      %v608 = vmax.f32 %v488, 0.0
      %v609 = vmax.f32 %v489, 0.0
      %v610 = vmax.f32 %v490, 0.0
      %v611 = vmax.f32 %v491, 0.0
      %v612 = vmax.f32 %v492, 0.0
      %v613 = vmax.f32 %v493, 0.0
      %v614 = vmax.f32 %v494, 0.0
      %v615 = vmax.f32 %v495, 0.0
      %v616 = vmax.f32 %v496, 0.0
      %v617 = vmax.f32 %v497, 0.0
      %v618 = vmax.f32 %v498, 0.0
      %v619 = vmax.f32 %v499, 0.0
      %v620 = vmax.f32 %v500, 0.0
      %v621 = vmax.f32 %v501, 0.0
      %v622 = vmax.f32 %v502, 0.0
      %v623 = vmax.f32 %v503, 0.0
      %v624 = vmax.f32 %v504, 0.0
      %v625 = vmax.f32 %v505, 0.0
      %v626 = vmax.f32 %v506, 0.0
      %v627 = vmax.f32 %v507, 0.0
      %v628 = vmax.f32 %v508, 0.0
      %v629 = vmax.f32 %v509, 0.0
      %v630 = vmax.f32 %v510, 0.0
      %v631 = vmax.f32 %v511, 0.0
      %v632 = vmax.f32 %v512, 0.0
      %v633 = vmax.f32 %v513, 0.0
      %v634 = vmax.f32 %v514, 0.0
      %v635 = vmax.f32 %v515, 0.0
      %v636 = vmax.f32 %v516, 0.0
      %v637 = vmax.f32 %v517, 0.0
      %v638 = vmax.f32 %v518, 0.0
      %v639 = vmax.f32 %v519, 0.0
      %v640 = vmax.f32 %v520, 0.0
      %v641 = vmax.f32 %v521, 0.0
      %v642 = vmax.f32 %v522, 0.0
      %v643 = vmax.f32 %v523, 0.0
      %v644 = vmax.f32 %v524, 0.0
      %v645 = vmax.f32 %v525, 0.0
      %v646 = vmax.f32 %v526, 0.0
      %v647 = vmax.f32 %v527, 0.0
      %v648 = vmax.f32 %v528, 0.0
      %v649 = vmax.f32 %v529, 0.0
      %v650 = vmax.f32 %v530, 0.0
      %v651 = vmax.f32 %v531, 0.0
      %v652 = vmax.f32 %v532, 0.0
      %v653 = vmax.f32 %v533, 0.0
      %v654 = vmax.f32 %v534, 0.0
      %v655 = vmax.f32 %v535, 0.0
      %v656 = vmax.f32 %v536, 0.0
      %v657 = vmax.f32 %v537, 0.0
      %v658 = vmax.f32 %v538, 0.0
      %v659 = vmax.f32 %v539, 0.0
      %v660 = vmax.f32 %v540, 0.0
      %v661 = vmax.f32 %v541, 0.0
      %v662 = vmax.f32 %v542, 0.0
      %v663 = vmax.f32 %v543, 0.0
      %v664 = vmax.f32 %v544, 0.0
      %v665 = vmax.f32 %v545, 0.0
      %v666 = vmax.f32 %v546, 0.0
      %v667 = vmax.f32 %v547, 0.0
      %v668 = vmax.f32 %v548, 0.0
      %v669 = vmax.f32 %v549, 0.0
      %v670 = vmax.f32 %v550, 0.0
      %v671 = vmax.f32 %v551, 0.0
      %v672 = vmax.f32 %v552, 0.0
      %v673 = vmax.f32 %v553, 0.0
      %v674 = vmax.f32 %v554, 0.0
      %v675 = vmax.f32 %v555, %v559
      %v676 = vmax.f32 %v556, %v560
      %vm677 = vcmask 1046528
      %v678 = vsel %vm677, %v557, -inf
      %v679 = vsel %vm677, %v561, -inf
      %v680 = vmax.f32 %v678, %v679
      %v681 = vsel %vm677, %v558, -inf
      %v682 = vsel %vm677, %v562, -inf
      %v683 = vmax.f32 %v681, %v682
      %v684 = vmax.f32 %v563, %v567
      %v685 = vmax.f32 %v564, %v568
      %v686 = vsel %vm677, %v565, -inf
      %v687 = vsel %vm677, %v569, -inf
      %v688 = vmax.f32 %v686, %v687
      %v689 = vsel %vm677, %v566, -inf
      %v690 = vsel %vm677, %v570, -inf
      %v691 = vmax.f32 %v689, %v690
      %v692 = vmax.f32 %v571, %v575
      %v693 = vmax.f32 %v572, %v576
      %v694 = vsel %vm677, %v573, -inf
      %v695 = vsel %vm677, %v577, -inf
      %v696 = vmax.f32 %v694, %v695
      %v697 = vsel %vm677, %v574, -inf
      %v698 = vsel %vm677, %v578, -inf
      %v699 = vmax.f32 %v697, %v698
      %v700 = vmax.f32 %v579, %v583
      %v701 = vmax.f32 %v580, %v584
      %v702 = vsel %vm677, %v581, -inf
      %v703 = vsel %vm677, %v585, -inf
      %v704 = vmax.f32 %v702, %v703
      %v705 = vsel %vm677, %v582, -inf
      %v706 = vsel %vm677, %v586, -inf
      %v707 = vmax.f32 %v705, %v706
      %v708 = vmax.f32 %v587, %v591
      %v709 = vmax.f32 %v588, %v592
      %v710 = vsel %vm677, %v589, -inf
      %v711 = vsel %vm677, %v593, -inf
      %v712 = vmax.f32 %v710, %v711
      %v713 = vsel %vm677, %v590, -inf
      %v714 = vsel %vm677, %v594, -inf
      %v715 = vmax.f32 %v713, %v714
      %v716 = vmax.f32 %v595, %v599
      %v717 = vmax.f32 %v596, %v600
      %v718 = vsel %vm677, %v597, -inf
      %v719 = vsel %vm677, %v601, -inf
      %v720 = vmax.f32 %v718, %v719
      %v721 = vsel %vm677, %v598, -inf
      %v722 = vsel %vm677, %v602, -inf
      %v723 = vmax.f32 %v721, %v722
      %v724 = vmax.f32 %v603, %v607
      %v725 = vmax.f32 %v604, %v608
      %v726 = vsel %vm677, %v605, -inf
      %v727 = vsel %vm677, %v609, -inf
      %v728 = vmax.f32 %v726, %v727
      %v729 = vsel %vm677, %v606, -inf
      %v730 = vsel %vm677, %v610, -inf
      %v731 = vmax.f32 %v729, %v730
      %v732 = vmax.f32 %v611, %v615
      %v733 = vmax.f32 %v612, %v616
      %v734 = vsel %vm677, %v613, -inf
      %v735 = vsel %vm677, %v617, -inf
      %v736 = vmax.f32 %v734, %v735
      %v737 = vsel %vm677, %v614, -inf
      %v738 = vsel %vm677, %v618, -inf
      %v739 = vmax.f32 %v737, %v738
      %v740 = vmax.f32 %v619, %v623
      %v741 = vmax.f32 %v620, %v624
      %v742 = vsel %vm677, %v621, -inf
      %v743 = vsel %vm677, %v625, -inf
      %v744 = vmax.f32 %v742, %v743
      %v745 = vsel %vm677, %v622, -inf
      %v746 = vsel %vm677, %v626, -inf
      %v747 = vmax.f32 %v745, %v746
      %v748 = vmax.f32 %v627, %v631
      %v749 = vmax.f32 %v628, %v632
      %v750 = vsel %vm677, %v629, -inf
      %v751 = vsel %vm677, %v633, -inf
      %v752 = vmax.f32 %v750, %v751
      %v753 = vsel %vm677, %v630, -inf
      %v754 = vsel %vm677, %v634, -inf
      %v755 = vmax.f32 %v753, %v754
      %v756 = vmax.f32 %v635, %v639
      %v757 = vmax.f32 %v636, %v640
      %v758 = vsel %vm677, %v637, -inf
      %v759 = vsel %vm677, %v641, -inf
      %v760 = vmax.f32 %v758, %v759
      %v761 = vsel %vm677, %v638, -inf
      %v762 = vsel %vm677, %v642, -inf
      %v763 = vmax.f32 %v761, %v762
      %v764 = vmax.f32 %v643, %v647
      %v765 = vmax.f32 %v644, %v648
      %v766 = vsel %vm677, %v645, -inf
      %v767 = vsel %vm677, %v649, -inf
      %v768 = vmax.f32 %v766, %v767
      %v769 = vsel %vm677, %v646, -inf
      %v770 = vsel %vm677, %v650, -inf
      %v771 = vmax.f32 %v769, %v770
      %v772 = vmax.f32 %v651, %v655
      %v773 = vmax.f32 %v652, %v656
      %v774 = vsel %vm677, %v653, -inf
      %v775 = vsel %vm677, %v657, -inf
      %v776 = vmax.f32 %v774, %v775
      %v777 = vsel %vm677, %v654, -inf
      %v778 = vsel %vm677, %v658, -inf
      %v779 = vmax.f32 %v777, %v778
      %v780 = vmax.f32 %v659, %v663
      %v781 = vmax.f32 %v660, %v664
      %v782 = vsel %vm677, %v661, -inf
      %v783 = vsel %vm677, %v665, -inf
      %v784 = vmax.f32 %v782, %v783
      %v785 = vsel %vm677, %v662, -inf
      %v786 = vsel %vm677, %v666, -inf
      %v787 = vmax.f32 %v785, %v786
      %v788 = vmax.f32 %v667, %v671
      %v789 = vmax.f32 %v668, %v672
      %v790 = vsel %vm677, %v669, -inf
      %v791 = vsel %vm677, %v673, -inf
      %v792 = vmax.f32 %v790, %v791
      %v793 = vsel %vm677, %v670, -inf
      %v794 = vsel %vm677, %v674, -inf
      %v795 = vmax.f32 %v793, %v794
      %v796 = vmax.f32 %v675, %v676
      %v797 = vmax.f32 %v680, %v683
      %v798 = vmax.f32 %v684, %v685
      %v799 = vmax.f32 %v688, %v691
      %v800 = vmax.f32 %v692, %v693
      %v801 = vmax.f32 %v696, %v699
      %v802 = vmax.f32 %v700, %v701
      %v803 = vmax.f32 %v704, %v707
      %v804 = vmax.f32 %v708, %v709
      %v805 = vmax.f32 %v712, %v715
      %v806 = vmax.f32 %v716, %v717
      %v807 = vmax.f32 %v720, %v723
      %v808 = vmax.f32 %v724, %v725
      %v809 = vmax.f32 %v728, %v731
      %v810 = vmax.f32 %v732, %v733
      %v811 = vmax.f32 %v736, %v739
      %v812 = vmax.f32 %v740, %v741
      %v813 = vmax.f32 %v744, %v747
      %v814 = vmax.f32 %v748, %v749
      %v815 = vmax.f32 %v752, %v755
      %v816 = vmax.f32 %v756, %v757
      %v817 = vmax.f32 %v760, %v763
      %v818 = vmax.f32 %v764, %v765
      %v819 = vmax.f32 %v768, %v771
      %v820 = vmax.f32 %v772, %v773
      %v821 = vmax.f32 %v776, %v779
      %v822 = vmax.f32 %v780, %v781
      %v823 = vmax.f32 %v784, %v787
      %v824 = vmax.f32 %v788, %v789
      %v825 = vmax.f32 %v792, %v795
      %826 = vst [vmem:[%s170] sm:$0xff] %v796
      %827 = vst [vmem:[%s170 + $0x8] sm:$0x7f] %v797
      %828 = vst [vmem:[%s170 + $0x10] sm:$0xff] %v798
      %829 = vst [vmem:[%s170 + $0x18] sm:$0x7f] %v799
      %830 = vst [vmem:[%s170 + $0x20] sm:$0xff] %v800
      %831 = vst [vmem:[%s170 + $0x28] sm:$0x7f] %v801
      %832 = vst [vmem:[%s170 + $0x30] sm:$0xff] %v802
      %833 = vst [vmem:[%s170 + $0x38] sm:$0x7f] %v803
      %834 = vst [vmem:[%s170 + $0x40] sm:$0xff] %v804
      %835 = vst [vmem:[%s170 + $0x48] sm:$0x7f] %v805
      %836 = vst [vmem:[%s170 + $0x50] sm:$0xff] %v806
      %837 = vst [vmem:[%s170 + $0x58] sm:$0x7f] %v807
      %838 = vst [vmem:[%s170 + $0x60] sm:$0xff] %v808
      %839 = vst [vmem:[%s170 + $0x68] sm:$0x7f] %v809
      %840 = vst [vmem:[%s170 + $0x70] sm:$0xff] %v810
      %841 = vst [vmem:[%s170 + $0x78] sm:$0x7f] %v811
      %842 = vst [vmem:[%s170 + $0x80] sm:$0xff] %v812
      %843 = vst [vmem:[%s170 + $0x88] sm:$0x7f] %v813
      %844 = vst [vmem:[%s170 + $0x90] sm:$0xff] %v814
      %845 = vst [vmem:[%s170 + $0x98] sm:$0x7f] %v815
      %846 = vst [vmem:[%s170 + $0xa0] sm:$0xff] %v816
      %847 = vst [vmem:[%s170 + $0xa8] sm:$0x7f] %v817
      %848 = vst [vmem:[%s170 + $0xb0] sm:$0xff] %v818
      %849 = vst [vmem:[%s170 + $0xb8] sm:$0x7f] %v819
      %850 = vst [vmem:[%s170 + $0xc0] sm:$0xff] %v820
      %851 = vst [vmem:[%s170 + $0xc8] sm:$0x7f] %v821
      %852 = vst [vmem:[%s170 + $0xd0] sm:$0xff] %v822
      %853 = vst [vmem:[%s170 + $0xd8] sm:$0x7f] %v823
      %854 = vst [vmem:[%s170 + $0xe0] sm:$0xff] %v824
      %855 = vst [vmem:[%s170 + $0xe8] sm:$0x7f] %v825
      %p856 = scmp.lt.s32.totalorder %s14, 1
      %s857 = scalar_select %p856, %s14, 1
      %s858 = smul.addr %s857, 30
      %s859 = smul.addr %s858, 8
      %s860 = scalar_lea.vmem %s3, %s859
      // Predicated region
      $region33: #{lenet_enc.5} parent=31 // pred_check
        %p861 = pneg %p100
      $region34: #{lenet_enc.5} parent=31 // pred_check_branch
        %863 = sbr.rel (%p861) target = $region36
      $region35: #{lenet_enc.5} parent=31 // pred_region
        _
      $region36: #{lenet_enc.5} parent=31 // pred_fallthru
        _
    $region32: #{lenet_enc.5} parent=5 // pred_fallthru
      _
    %p864 = scmp.le.s32.totalorder 2, %s9
    // Predicated region
    $region37: #{lenet_enc.5} parent=5 // pred_check
      %p865 = pneg %p864
    $region38: #{lenet_enc.5} parent=5 // pred_check_branch
      %867 = sbr.rel (%p865) target = $region40
    $region39: #{lenet_enc.5} parent=5 // pred_region
      %s868 = ssub.s32 %s9, 2
      // Predicated region
      $region41: #{lenet_enc.5} parent=39 // pred_check
        %p869 = pneg %p106
      $region42: #{lenet_enc.5} parent=39 // pred_check_branch
        %871 = sbr.rel (%p869) target = $region44
      $region43: #{lenet_enc.5} parent=39 // pred_region
        %p872 = scmp.lt.s32.totalorder %s15, 1
        %s873 = scalar_select %p872, %s15, 1
        %s874 = smul.addr %s873, 30
        %s875 = smul.addr %s874, 8
        %s876 = scalar_lea.vmem %s3, %s875
      $region44: #{lenet_enc.5} parent=39 // pred_fallthru
        _
    $region40: #{lenet_enc.5} parent=5 // pred_fallthru
      _
  $region6: #{lenet_enc.5} parent=0 // loop_footer
    %s13 = sadd.s32 1, %s9
  $region7: #{lenet_enc.5} parent=0 // loop_footer_branch
    %8 = sbr.rel target = $region3
  $region8: #{lenet_enc.5} parent=0 // loop_exit
    _

// kernel: lenet_enc.6
$region0: #{lenet_enc.6}
  #allocation0 [shape = 'u32[]', space=smem, size = 0x4, offset = 0x4, fixed_abs, tag = 'smem constant byte address 0x4 - core index']
  #allocation1 [shape = 'u32[144,128]{1,0:T(1,128)}', space=vmem, size = 0x12000, scoped, tag = 'internal scratch']
  %s0 = inlined_call_operand.vmem [shape: bf16[72,100], index: 0, kind: input, shape index: {}]
  %s1 = inlined_call_operand.vmem [shape: bf16[100,128], index: 1, kind: input, shape index: {}]
  %s2 = inlined_call_operand.vmem [shape: f32[72,128], index: 2, kind: output, shape index: {0}]
  %s3 = inlined_call_operand.vmem [shape: f32[1,2,128], index: 3, kind: output, shape index: {1}]
  %4 = xla_tuple %s2, %s3
  %s5 = sld [smem:[#allocation0]]
  $region26: #{lenet_enc.6} parent=0
    _
  %s7 = ssub.s32 1, %s5
  %s8 = scalar_select 0, %s7, %s5
  // Predicated region
  $region2: #{lenet_enc.6} parent=0 // pred_check
    _
  $region3: #{lenet_enc.6} parent=0 // pred_check_branch
    %10 = sbr.rel (0) target = $region5
  $region4: #{lenet_enc.6} parent=0 // pred_region
    _
  $region5: #{lenet_enc.6} parent=0 // pred_fallthru
    _
  // Predicated region
  $region6: #{lenet_enc.6} parent=0 // pred_check
    _
  $region7: #{lenet_enc.6} parent=0 // pred_check_branch
    %12 = sbr.rel (0) target = $region9
  $region8: #{lenet_enc.6} parent=0 // pred_region
    _
  $region9: #{lenet_enc.6} parent=0 // pred_fallthru
    _
  %v14 = vld [vmem:[%s0] sm:$0xf]
  %v15 = vld [vmem:[%s0 + $0x4] sm:$0xf]
  %v16 = vld [vmem:[%s0 + $0x8] sm:$0xf]
  %v17 = vld [vmem:[%s0 + $0xc] sm:$0xf]
  %v18 = vld [vmem:[%s0 + $0x10] sm:$0xf]
  %v19 = vld [vmem:[%s0 + $0x14] sm:$0xf]
  %v20 = vld [vmem:[%s0 + $0x18] sm:$0xf]
  %v21 = vld [vmem:[%s0 + $0x1c] sm:$0xf]
  %v22 = vld [vmem:[%s0 + $0x20] sm:$0xf]
  %v23 = vld [vmem:[%s1] sm:$0xf]
  %v24 = vld [vmem:[%s1 + $0x4] sm:$0xf]
  %v25 = vld [vmem:[%s1 + $0x8] sm:$0xf]
  %v26 = vld [vmem:[%s1 + $0xc] sm:$0xf]
  %v27 = vld [vmem:[%s1 + $0x10] sm:$0xf]
  %v28 = vld [vmem:[%s1 + $0x14] sm:$0xf]
  %v29 = vld [vmem:[%s1 + $0x18] sm:$0xf]
  %v30 = vld [vmem:[%s1 + $0x1c] sm:$0xf]
  %v31 = vld [vmem:[%s1 + $0x20] sm:$0xf]
  %v32 = vld [vmem:[%s1 + $0x24] sm:$0xf]
  %v33 = vld [vmem:[%s1 + $0x28] sm:$0xf]
  %v34 = vld [vmem:[%s1 + $0x2c] sm:$0xf]
  %v35 = vld [vmem:[%s1 + $0x30] sm:$0x3]
  %v45 = vunpack.c.l.b16 %v14
  %v46 = vunpack.c.l.b16 %v15
  %v47 = vunpack.c.l.b16 %v16
  %v48 = vunpack.c.l.b16 %v17
  %v49 = vunpack.c.l.b16 %v18
  %v50 = vunpack.c.l.b16 %v19
  %v51 = vunpack.c.l.b16 %v20
  %v52 = vunpack.c.l.b16 %v21
  %v53 = vunpack.c.l.b16 %v22
  %v54 = vpack.c.b16 %v46, %v45
  %v55 = vpack.c.b16 %v48, %v47
  %v56 = vpack.c.b16 %v50, %v49
  %v57 = vpack.c.b16 %v52, %v51
  %v58 = vpack.c.b16 %v53, %v53
  %v72 = vunpack.c.l.b16 %v23
  %v73 = vunpack.c.l.b16 %v24
  %v74 = vunpack.c.l.b16 %v25
  %v75 = vunpack.c.l.b16 %v26
  %v76 = vunpack.c.l.b16 %v27
  %v77 = vunpack.c.l.b16 %v28
  %v78 = vunpack.c.l.b16 %v29
  %v79 = vunpack.c.l.b16 %v30
  %v80 = vunpack.c.l.b16 %v31
  %v81 = vunpack.c.l.b16 %v32
  %v82 = vunpack.c.l.b16 %v33
  %v83 = vunpack.c.l.b16 %v34
  %v84 = vunpack.c.l.b16 %v35
  %v85 = vpack.c.b16 %v73, %v72
  %v86 = vpack.c.b16 %v75, %v74
  %v87 = vpack.c.b16 %v77, %v76
  %v88 = vpack.c.b16 %v79, %v78
  %v89 = vpack.c.b16 %v81, %v80
  %v90 = vpack.c.b16 %v83, %v82
  %v91 = vpack.c.b16 %v84, %v84
  %vm98 = vcmask 818176
  %v100 = vsel %vm98, %v54, 0
  %v103 = vsel %vm98, %v55, 0
  %v106 = vsel %vm98, %v56, 0
  %v109 = vsel %vm98, %v57, 0
  %v112 = vsel %vm98, %v58, 0
  %vm114 = vcmask 1041408
  %v116 = vsel %vm114, %v91, 0
  %118 = vmatprep.subr.bf16.mxu0 0
  %119 = vmatpush1.bf16.msra.mxu0 %v85
  %120 = vmatprep.subr.bf16.mxu0 0
  %121 = vmatpush1.bf16.msra.mxu0 %v86
  %122 = vmatprep.subr.bf16.mxu0 0
  %123 = vmatpush1.bf16.msra.mxu0 %v87
  %124 = vmatprep.subr.bf16.mxu0 0
  %125 = vmatpush1.bf16.msra.mxu0 %v88
  %126 = vmatprep.subr.bf16.mxu0 0
  %127 = vmatpush1.bf16.msra.mxu0 %v89
  %128 = vmatprep.subr.bf16.mxu0 0
  %129 = vmatpush1.bf16.msra.mxu0 %v90
  %130 = vmatprep.subr.bf16.mxu0 0
  %131 = vmatpush1.bf16.msra.mxu0 %v116
  %132 = vmatprep.subr.bf16.mxu0 0
  %133 = vmatpush1.bf16.msra.mxu0 0
  %134 = vmatprep.subr.bf16.mxu0 0
  %135 = vmatpush1.bf16.msra.mxu0 0
  %136 = vmatprep.subr.bf16.mxu0 0
  %137 = vmatpush1.bf16.msra.mxu0 0
  %138 = vmatprep.subr.bf16.mxu0 0
  %139 = vmatpush1.bf16.msra.mxu0 0
  %140 = vmatprep.subr.bf16.mxu0 0
  %141 = vmatpush1.bf16.msra.mxu0 0
  %142 = vmatprep.subr.bf16.mxu0 0
  %143 = vmatpush1.bf16.msra.mxu0 0
  %144 = vmatprep.subr.bf16.mxu0 0
  %145 = vmatpush1.bf16.msra.mxu0 0
  %146 = vmatprep.subr.bf16.mxu0 0
  %147 = vmatpush1.bf16.msra.mxu0 0
  %148 = vmatprep.subr.bf16.mxu0 0
  %149 = vmatpush1.bf16.msra.mxu0 0
  %150 = vmatprep.mubr.bf16.mxu0 0
  %151 = vmatmul.mubr.bf16.gmra.mrb[0].mxu0 %v100
  %v152 = vpop.f32.mrb[0].mxu0
  %v153 = vadd.f32 0.0, %v152
  %v154 = vpop.f32.mrb[0].mxu0
  %v155 = vpop.f32.mrb[0].mxu0
  %v156 = vadd.f32 0.0, %v155
  %v157 = vpop.f32.mrb[0].mxu0
  %158 = vmatprep.mubr.bf16.mxu0 0
  %159 = vmatmul.mubr.bf16.gmra.mrb[0].mxu0 %v103
  %v160 = vpop.f32.mrb[0].mxu0
  %v161 = vadd.f32 0.0, %v160
  %v162 = vpop.f32.mrb[0].mxu0
  %v163 = vpop.f32.mrb[0].mxu0
  %v164 = vadd.f32 0.0, %v163
  %v165 = vpop.f32.mrb[0].mxu0
  %166 = vmatprep.mubr.bf16.mxu0 0
  %167 = vmatmul.mubr.bf16.gmra.mrb[0].mxu0 %v106
  %v168 = vpop.f32.mrb[0].mxu0
  %v169 = vadd.f32 0.0, %v168
  %v170 = vpop.f32.mrb[0].mxu0
  %v171 = vpop.f32.mrb[0].mxu0
  %v172 = vadd.f32 0.0, %v171
  %v173 = vpop.f32.mrb[0].mxu0
  %174 = vmatprep.mubr.bf16.mxu0 0
  %175 = vmatmul.mubr.bf16.gmra.mrb[0].mxu0 %v109
  %v176 = vpop.f32.mrb[0].mxu0
  %v177 = vadd.f32 0.0, %v176
  %v178 = vpop.f32.mrb[0].mxu0
  %v179 = vpop.f32.mrb[0].mxu0
  %v180 = vadd.f32 0.0, %v179
  %v181 = vpop.f32.mrb[0].mxu0
  %182 = vmatprep.mubr.bf16.mxu0 0
  %183 = vmatmul.mubr.bf16.gmra.mrb[0].mxu0 %v112
  %v184 = vpop.f32.mrb[0].mxu0
  %v185 = vadd.f32 0.0, %v184
  %v186 = vpop.f32.mrb[0].mxu0
  %v187 = vpop.f32.mrb[0].mxu0
  %v188 = vpop.f32.mrb[0].mxu0
  %189 = vdwg.mxu0
  %190 = vst [vmem:[%s2] sm:$0xff] %v153
  %191 = vst [vmem:[%s2 + $0x8] sm:$0xff] %v156
  %192 = vst [vmem:[%s2 + $0x10] sm:$0xff] %v161
  %193 = vst [vmem:[%s2 + $0x18] sm:$0xff] %v164
  %194 = vst [vmem:[%s2 + $0x20] sm:$0xff] %v169
  %195 = vst [vmem:[%s2 + $0x28] sm:$0xff] %v172
  %196 = vst [vmem:[%s2 + $0x30] sm:$0xff] %v177
  %197 = vst [vmem:[%s2 + $0x38] sm:$0xff] %v180
  %198 = vst [vmem:[%s2 + $0x40] sm:$0xff] %v185
  %v199 = vadd.f32 %v153, %v156
  %v200 = vadd.f32 %v199, %v161
  %v201 = vadd.f32 %v200, %v164
  %v202 = vadd.f32 %v201, %v169
  %v203 = vadd.f32 %v202, %v172
  %v204 = vadd.f32 %v203, %v177
  %v205 = vadd.f32 %v204, %v180
  %v206 = vadd.f32 %v205, %v185
  %v207 = vrot.slane %v206, 4
  %v208 = vadd.f32 %v206, %v207
  %v209 = vrot.slane %v208, 2
  %v210 = vadd.f32 %v208, %v209
  %v211 = vrot.slane %v210, 1
  %v212 = vadd.f32 %v210, %v211
  %v213 = vmul.f32 %v153, %v153
  %v214 = vmul.f32 %v156, %v156
  %v215 = vmul.f32 %v161, %v161
  %v216 = vmul.f32 %v164, %v164
  %v217 = vmul.f32 %v169, %v169
  %v218 = vmul.f32 %v172, %v172
  %v219 = vmul.f32 %v177, %v177
  %v220 = vmul.f32 %v180, %v180
  %v221 = vmul.f32 %v185, %v185
  %v222 = vadd.f32 %v213, %v214
  %v223 = vadd.f32 %v222, %v215
  %v224 = vadd.f32 %v223, %v216
  %v225 = vadd.f32 %v224, %v217
  %v226 = vadd.f32 %v225, %v218
  %v227 = vadd.f32 %v226, %v219
  %v228 = vadd.f32 %v227, %v220
  %v229 = vadd.f32 %v228, %v221
  %v230 = vrot.slane %v229, 4
  %v231 = vadd.f32 %v229, %v230
  %v232 = vrot.slane %v231, 2
  %v233 = vadd.f32 %v231, %v232
  %v234 = vrot.slane %v233, 1
  %v235 = vadd.f32 %v233, %v234
  %vm236 = vcmask 1040384
  %v237 = vsel %vm236, %v212, %v235
  %238 = vst [vmem:[%s3] sm:$0x3] %v237
  // Predicated region
  $region10: #{lenet_enc.6} parent=0 // pred_check
    _
  $region11: #{lenet_enc.6} parent=0 // pred_check_branch
    %240 = sbr.rel (0) target = $region13
  $region12: #{lenet_enc.6} parent=0 // pred_region
    _
  $region13: #{lenet_enc.6} parent=0 // pred_fallthru
    _
  // Predicated region
  $region14: #{lenet_enc.6} parent=0 // pred_check
    _
  $region15: #{lenet_enc.6} parent=0 // pred_check_branch
    %242 = sbr.rel (0) target = $region17
  $region16: #{lenet_enc.6} parent=0 // pred_region
    _
  $region17: #{lenet_enc.6} parent=0 // pred_fallthru
    _
  // Predicated region
  $region18: #{lenet_enc.6} parent=0 // pred_check
    _
  $region19: #{lenet_enc.6} parent=0 // pred_check_branch
    %244 = sbr.rel (0) target = $region21
  $region20: #{lenet_enc.6} parent=0 // pred_region
    _
  $region21: #{lenet_enc.6} parent=0 // pred_fallthru
    _
  // Predicated region
  $region22: #{lenet_enc.6} parent=0 // pred_check
    _
  $region23: #{lenet_enc.6} parent=0 // pred_check_branch
    %246 = sbr.rel (0) target = $region25
  $region24: #{lenet_enc.6} parent=0 // pred_region
    _
  $region25: #{lenet_enc.6} parent=0 // pred_fallthru
    _

// kernel: lenet_enc.7
$region0: #{lenet_enc.7}
  #allocation0 [shape = 'u32[]', space=smem, size = 0x4, offset = 0x4, fixed_abs, tag = 'smem constant byte address 0x4 - core index']
  #allocation1 [shape = 'u32[144,128]{1,0:T(1,128)}', space=vmem, size = 0x12000, scoped, tag = 'internal scratch']
  %s0 = inlined_call_operand.vmem [shape: f32[2,6,3,256], index: 0, kind: input, shape index: {}]
  %s1 = inlined_call_operand.vmem [shape: f32[1,256], index: 1, kind: input, shape index: {}]
  %s2 = inlined_call_operand.vmem [shape: f32[1,256], index: 2, kind: input, shape index: {}]
  %s3 = inlined_call_operand.vmem [shape: f32[2,3,3,128], index: 3, kind: output, shape index: {}]
  %s4 = sld [smem:[#allocation0]]
  $region45: #{lenet_enc.7} parent=0
    _
  %s6 = ssub.s32 1, %s4
  %s7 = scalar_select 0, %s6, %s4
  loop: start=0, step=1, limit=4
  $region2: #{lenet_enc.7} parent=0 // loop_pre_header
    _
  $region3: #{lenet_enc.7} parent=0 // loop_header
    %s9 = sphi 0, %s13
    %p10 = scmp.ge.s32.totalorder %s9, 4
    %s19 = sphi 0, %s21
    %s22 = sphi 0, %s19
    %s23 = sphi 0, %s22
    %s39 = sphi 0, %s23
    %s43 = sphi 0, %s43
    %s45 = sphi 0, %s43
    %s46 = sphi 0, %s45
    %s60 = sphi 0, %s46
    %s64 = sphi 0, %s64
    %s66 = sphi 0, %s64
    %s67 = sphi 0, %s66
    %s81 = sphi 0, %s67
    %s87 = sphi 0, %s89
    %s90 = sphi 0, %s87
    %s91 = sphi 0, %s90
    %s107 = sphi 0, %s91
  $region4: #{lenet_enc.7} parent=0 // loop_header_branch
    %12 = sbr.rel (%p10) target = $region8
  $region5: #{lenet_enc.7} parent=0 // loop_body
    %s14 = ssub.s32 %s9, 1
    %s15 = ssub.s32 %s9, 2
    %s16 = sadd.s32 %s9, 1
    %s17 = ssub.s32 %s9, %s16
    %p18 = scmp.eq.s32.totalorder %s17, 0
    %s20 = sadd.s32 %s19, 1
    %s21 = scalar_select %p18, %s19, %s20
    %p24 = pneg %p18
    %p25 = scmp.eq.s32.totalorder %s9, 1
    %p26 = por %p24, %p25
    %p27 = scmp.ne.s32.totalorder %s19, %s22
    %p28 = scmp.eq.s32.totalorder %s9, 0
    %p29 = por %p27, %p28
    %p30 = scmp.ne.s32.totalorder %s19, %s22
    %p31 = scmp.eq.s32.totalorder %s14, 1
    %p32 = por %p30, %p31
    %p33 = scmp.ne.s32.totalorder %s22, %s23
    %p34 = scmp.eq.s32.totalorder %s14, 0
    %p35 = por %p33, %p34
    %p36 = scmp.ne.s32.totalorder %s22, %s23
    %p37 = scmp.eq.s32.totalorder %s15, 1
    %p38 = por %p36, %p37
    %p40 = scmp.ne.s32.totalorder %s23, %s39
    %p41 = scmp.eq.s32.totalorder %s15, 0
    %p42 = por %p40, %p41
    %s44 = sadd.s32 %s43, 1
    %p47 = scmp.eq.s32.totalorder %s9, 1
    %p48 = scmp.ne.s32.totalorder %s43, %s45
    %p49 = scmp.eq.s32.totalorder %s9, 0
    %p50 = por %p48, %p49
    %p51 = scmp.ne.s32.totalorder %s43, %s45
    %p52 = scmp.eq.s32.totalorder %s14, 1
    %p53 = por %p51, %p52
    %p54 = scmp.ne.s32.totalorder %s45, %s46
    %p55 = scmp.eq.s32.totalorder %s14, 0
    %p56 = por %p54, %p55
    %p57 = scmp.ne.s32.totalorder %s45, %s46
    %p58 = scmp.eq.s32.totalorder %s15, 1
    %p59 = por %p57, %p58
    %p61 = scmp.ne.s32.totalorder %s46, %s60
    %p62 = scmp.eq.s32.totalorder %s15, 0
    %p63 = por %p61, %p62
    %s65 = sadd.s32 %s64, 1
    %p68 = scmp.eq.s32.totalorder %s9, 1
    %p69 = scmp.ne.s32.totalorder %s64, %s66
    %p70 = scmp.eq.s32.totalorder %s9, 0
    %p71 = por %p69, %p70
    %p72 = scmp.ne.s32.totalorder %s64, %s66
    %p73 = scmp.eq.s32.totalorder %s14, 1
    %p74 = por %p72, %p73
    %p75 = scmp.ne.s32.totalorder %s66, %s67
    %p76 = scmp.eq.s32.totalorder %s14, 0
    %p77 = por %p75, %p76
    %p78 = scmp.ne.s32.totalorder %s66, %s67
    %p79 = scmp.eq.s32.totalorder %s15, 1
    %p80 = por %p78, %p79
    %p82 = scmp.ne.s32.totalorder %s67, %s81
    %p83 = scmp.eq.s32.totalorder %s15, 0
    %p84 = por %p82, %p83
    %s85 = ssub.s32 %s9, %s16
    %p86 = scmp.eq.s32.totalorder %s85, 0
    %s88 = sadd.s32 %s87, 1
    %s89 = scalar_select %p86, %s87, %s88
    %p92 = pneg %p86
    %p93 = scmp.eq.s32.totalorder %s9, 1
    %p94 = por %p92, %p93
    %p95 = scmp.ne.s32.totalorder %s87, %s90
    %p96 = scmp.eq.s32.totalorder %s9, 0
    %p97 = por %p95, %p96
    %p98 = scmp.ne.s32.totalorder %s87, %s90
    %p99 = scmp.eq.s32.totalorder %s14, 1
    %p100 = por %p98, %p99
    %p101 = scmp.ne.s32.totalorder %s90, %s91
    %p102 = scmp.eq.s32.totalorder %s14, 0
    %p103 = por %p101, %p102
    %p104 = scmp.ne.s32.totalorder %s90, %s91
    %p105 = scmp.eq.s32.totalorder %s15, 1
    %p106 = por %p104, %p105
    %p108 = scmp.ne.s32.totalorder %s91, %s107
    %p109 = scmp.eq.s32.totalorder %s15, 0
    %p110 = por %p108, %p109
    %p111 = scmp.le.s32.totalorder 1, %s9
    %p112 = scmp.lt.s32.totalorder %s9, 3
    %p113 = pnand %p111, %p112
    %p114 = pneg %p113
    // Predicated region
    $region9: #{lenet_enc.7} parent=5 // pred_check
      _
    $region10: #{lenet_enc.7} parent=5 // pred_check_branch
      %116 = sbr.rel (%p113) target = $region12
    $region11: #{lenet_enc.7} parent=5 // pred_region
      %s117 = ssub.s32 %s9, 1
      // Predicated region
      $region13: #{lenet_enc.7} parent=11 // pred_check
        %p118 = pneg %p56
      $region14: #{lenet_enc.7} parent=11 // pred_check_branch
        %120 = sbr.rel (%p118) target = $region16
      $region15: #{lenet_enc.7} parent=11 // pred_region
        _
      $region16: #{lenet_enc.7} parent=11 // pred_fallthru
        _
      // Predicated region
      $region17: #{lenet_enc.7} parent=11 // pred_check
        %p121 = pneg %p77
      $region18: #{lenet_enc.7} parent=11 // pred_check_branch
        %123 = sbr.rel (%p121) target = $region20
      $region19: #{lenet_enc.7} parent=11 // pred_region
        _
      $region20: #{lenet_enc.7} parent=11 // pred_fallthru
        _
    $region12: #{lenet_enc.7} parent=5 // pred_fallthru
      _
    %p124 = scmp.lt.s32.totalorder %s9, 2
    // Predicated region
    $region21: #{lenet_enc.7} parent=5 // pred_check
      %p125 = pneg %p124
    $region22: #{lenet_enc.7} parent=5 // pred_check_branch
      %127 = sbr.rel (%p125) target = $region24
    $region23: #{lenet_enc.7} parent=5 // pred_region
      // Predicated region
      $region25: #{lenet_enc.7} parent=23 // pred_check
        %p128 = pneg %p29
      $region26: #{lenet_enc.7} parent=23 // pred_check_branch
        %130 = sbr.rel (%p128) target = $region28
      $region27: #{lenet_enc.7} parent=23 // pred_region
        %p131 = scmp.lt.s32.totalorder %s9, 1
        %s132 = scalar_select %p131, %s9, 1
        %s133 = smul.addr %s132, 12
        %s134 = smul.addr %s133, 4
        %s135 = scalar_lea.vmem %s0, %s134
      $region28: #{lenet_enc.7} parent=23 // pred_fallthru
        _
    $region24: #{lenet_enc.7} parent=5 // pred_fallthru
      _
    %p136 = scmp.le.s32.totalorder 1, %s9
    %p137 = scmp.lt.s32.totalorder %s9, 3
    %p138 = pnand %p136, %p137
    %p139 = pneg %p138
    // Predicated region
    $region29: #{lenet_enc.7} parent=5 // pred_check
      _
    $region30: #{lenet_enc.7} parent=5 // pred_check_branch
      %141 = sbr.rel (%p138) target = $region32
    $region31: #{lenet_enc.7} parent=5 // pred_region
      %s142 = ssub.s32 %s9, 1
      %p143 = scmp.lt.s32.totalorder %s14, 1
      %s144 = scalar_select %p143, %s14, 1
      %s145 = smul.addr %s144, 12
      %s146 = smul.addr %s145, 4
      %s147 = scalar_lea.vmem %s0, %s146
      %p148 = pneg %p35
      %p149 = pneg %p32
      %p150 = pneg %p56
      %p151 = pneg %p53
      %p152 = pneg %p77
      %p153 = pneg %p74
      %p154 = pneg %p103
      %p155 = pneg %p100
      %p156 = scmp.lt.s32.totalorder %s14, 1
      %s157 = scalar_select %p156, %s14, 1
      %s158 = smul.addr %s157, 3
      %s159 = smul.addr %s158, 4
      %s160 = scalar_lea.vmem %s3, %s159
      %p161 = scmp.lt.s32.totalorder %s14, 1
      %s162 = scalar_select %p161, %s14, 1
      %s163 = smul.addr %s162, 12
      %s164 = smul.addr %s163, 4
      %s165 = scalar_lea.vmem %s0, %s164
      %p166 = scmp.lt.s32.totalorder %s14, 1
      %s167 = scalar_select %p166, %s14, 1
      %s168 = smul.addr %s167, 3
      %s169 = smul.addr %s168, 4
      %s170 = scalar_lea.vmem %s3, %s169
      %v171 = vld [vmem:[%s1] sm:$0x3]
      %v172 = vld [vmem:[%s2] sm:$0x3]
      %v173 = vld [vmem:[%s165] sm:$0x77]
      %v174 = vld [vmem:[%s165 + $0x8] sm:$0x77]
      %v175 = vld [vmem:[%s165 + $0x10] sm:$0x77]
      %v176 = vld [vmem:[%s165 + $0x18] sm:$0x77]
      %v177 = vld [vmem:[%s165 + $0x20] sm:$0x77]
      %v178 = vld [vmem:[%s165 + $0x28] sm:$0x77]
      %v180 = vlaneseq
      %v181 = vshrl.u32 %v180, 7
      %v182 = vsub.s32 0, %v181
      %v183 = vrot.slane %v171, %v182
      %v184 = vlaneseq
      %v185 = vshrl.u32 %v184, 7
      %v186 = vsub.s32 1, %v185
      %v187 = vrot.slane %v171, %v186
      %v188 = vcombine.low %v183, %v187
      %v190 = vmul.f32 %v173, %v188
      %v191 = vmul.f32 %v174, %v188
      %v192 = vmul.f32 %v175, %v188
      %v193 = vmul.f32 %v176, %v188
      %v194 = vmul.f32 %v177, %v188
      %v195 = vmul.f32 %v178, %v188
      %v197 = vlaneseq
      %v198 = vshrl.u32 %v197, 7
      %v199 = vsub.s32 0, %v198
      %v200 = vrot.slane %v172, %v199
      %v201 = vlaneseq
      %v202 = vshrl.u32 %v201, 7
      %v203 = vsub.s32 1, %v202
      %v204 = vrot.slane %v172, %v203
      %v205 = vcombine.low %v200, %v204
      %v207 = vadd.f32 %v190, %v205
      %v208 = vadd.f32 %v191, %v205
      %v209 = vadd.f32 %v192, %v205
      %v210 = vadd.f32 %v193, %v205
      %v211 = vadd.f32 %v194, %v205
      %v212 = vadd.f32 %v195, %v205
      %v213 = vmax.f32 %v207, 0.0
      %v214 = vmax.f32 %v208, 0.0
      %v215 = vmax.f32 %v209, 0.0
      %v216 = vmax.f32 %v210, 0.0
      %v217 = vmax.f32 %v211, 0.0
      %v218 = vmax.f32 %v212, 0.0
      %vm219 = vcmask 1042432
      %vm220 = vcmask 1046532
      %vm221 = vmor %vm220, %vm219
      %v222 = vsel %vm221, %v213, -inf
      %v223 = vsel %vm221, %v214, -inf
      %v224 = vmax.f32 %v222, %v223
      %v225 = vsel %vm221, %v215, -inf
      %v226 = vsel %vm221, %v216, -inf
      %v227 = vmax.f32 %v225, %v226
      %v228 = vsel %vm221, %v217, -inf
      %v229 = vsel %vm221, %v218, -inf
      %v230 = vmax.f32 %v228, %v229
      %v234 = vrot.slane %v224, 4
      %v235 = vrot.slane %v227, 4
      %v236 = vrot.slane %v230, 4
      %v240 = vmax.f32 %v224, %v234
      %v241 = vmax.f32 %v227, %v235
      %v242 = vmax.f32 %v230, %v236
      %243 = vst [vmem:[%s170] sm:$0x7] %v240
      %244 = vst [vmem:[%s170 + $0x4] sm:$0x7] %v241
      %245 = vst [vmem:[%s170 + $0x8] sm:$0x7] %v242
      %p246 = scmp.lt.s32.totalorder %s14, 1
      %s247 = scalar_select %p246, %s14, 1
      %s248 = smul.addr %s247, 3
      %s249 = smul.addr %s248, 4
      %s250 = scalar_lea.vmem %s3, %s249
      // Predicated region
      $region33: #{lenet_enc.7} parent=31 // pred_check
        %p251 = pneg %p100
      $region34: #{lenet_enc.7} parent=31 // pred_check_branch
        %253 = sbr.rel (%p251) target = $region36
      $region35: #{lenet_enc.7} parent=31 // pred_region
        _
      $region36: #{lenet_enc.7} parent=31 // pred_fallthru
        _
    $region32: #{lenet_enc.7} parent=5 // pred_fallthru
      _
    %p254 = scmp.le.s32.totalorder 2, %s9
    // Predicated region
    $region37: #{lenet_enc.7} parent=5 // pred_check
      %p255 = pneg %p254
    $region38: #{lenet_enc.7} parent=5 // pred_check_branch
      %257 = sbr.rel (%p255) target = $region40
    $region39: #{lenet_enc.7} parent=5 // pred_region
      %s258 = ssub.s32 %s9, 2
      // Predicated region
      $region41: #{lenet_enc.7} parent=39 // pred_check
        %p259 = pneg %p106
      $region42: #{lenet_enc.7} parent=39 // pred_check_branch
        %261 = sbr.rel (%p259) target = $region44
      $region43: #{lenet_enc.7} parent=39 // pred_region
        %p262 = scmp.lt.s32.totalorder %s15, 1
        %s263 = scalar_select %p262, %s15, 1
        %s264 = smul.addr %s263, 3
        %s265 = smul.addr %s264, 4
        %s266 = scalar_lea.vmem %s3, %s265
      $region44: #{lenet_enc.7} parent=39 // pred_fallthru
        _
    $region40: #{lenet_enc.7} parent=5 // pred_fallthru
      _
  $region6: #{lenet_enc.7} parent=0 // loop_footer
    %s13 = sadd.s32 1, %s9
  $region7: #{lenet_enc.7} parent=0 // loop_footer_branch
    %8 = sbr.rel target = $region3
  $region8: #{lenet_enc.7} parent=0 // loop_exit
    _

</llo_original>
